<compile_context>
chip_gen: v6e
topology: v6e:2x2x1
jax: 0.10.0
libtpu: 0.0.40
codegen_flags: <defaults>
</compile_context>

<pallas_src>
import functools

import jax
import jax.numpy as jnp
from jax.experimental import pallas as pl
from jax.experimental.pallas import tpu as pltpu


def _round_up(x, m):
    return ((x + m - 1) // m) * m


def _round_down(x, m):
    return (x // m) * m


def _gmm_mlp_kernel(*refs, num_layers, out_dim, min_std, mlp_activation,
                    std_activation, use_scale_head, mxu_dtype):
    # refs = [x] + [w_i, b_i] * num_layers + [w_heads, b_heads] + [packed_out]
    x_ref = refs[0]
    w_refs = refs[1:1 + 2 * num_layers + 2]
    out_ref = refs[-1]

    def matmul(a, w_ref):
        # Weights were pre-cast to mxu_dtype in the wrapper; cast only the LHS here.
        return jnp.dot(a.astype(mxu_dtype), w_ref[...],
                       preferred_element_type=jnp.float32)

    h = x_ref[...]
    idx = 0
    for _ in range(num_layers):                      # static unroll (num_layers is small)
        h = matmul(h, w_refs[idx]) + w_refs[idx + 1][...]   # bias add in f32
        idx += 2
        if mlp_activation == 'relu':
            h = jnp.maximum(h, 0.0)
        else:                                        # 'leaky-relu' (torch default slope 0.01)
            h = jnp.where(h > 0.0, h, 0.01 * h)

    # Fused heads: single 128-lane-padded projection; per-column activation via iota mask.
    packed = matmul(h, w_refs[idx]) + w_refs[idx + 1][...]
    col = jax.lax.broadcasted_iota(jnp.int32, packed.shape, 1)
    means = jnp.tanh(packed)
    if use_scale_head:
        if std_activation == 'softplus':
            # softplus(x) = max(x,0) + log(1 + exp(-|x|))  (numerically stable)
            s = jnp.maximum(packed, 0.0) + jnp.log(1.0 + jnp.exp(-jnp.abs(packed)))
        else:                                        # 'exp'
            s = jnp.exp(packed)
        s = s + min_std
        out = jnp.where(col < out_dim, means,
                        jnp.where(col < 2 * out_dim, s, packed))
    else:
        out = jnp.where(col < out_dim, means, packed)
    out_ref[...] = out.astype(out_ref.dtype)


def _tpu_generation():
    """Return (usable_vmem_bytes, multicore) with conservative fallbacks."""
    vmem_cap = 128 * 2 ** 20
    multicore = False
    try:
        info = pltpu.get_tpu_info()
        vmem_cap = int(getattr(info, "vmem_capacity_bytes", vmem_cap))
    except Exception:
        pass
    try:
        kind = jax.devices()[0].device_kind.lower()
        # Dual-TensorCore chips: megacore (v4 / v5p) and v7x.
        multicore = any(tag in kind for tag in ("v4", "v5p", "7"))
        if "7" in kind:
            vmem_cap = min(vmem_cap, 64 * 2 ** 20)   # v7x: 64 MiB per TensorCore
    except Exception:
        pass
    return (vmem_cap * 3) // 4, multicore            # leave headroom for the compiler


def _pick_block_rows(batch, *, multicore, row_gran):
    """Rows per grid step: big MXU tiles; >=2 steps only where a 2nd TensorCore exists."""
    if batch <= row_gran:
        return batch
    cap = 256 if multicore else 512
    bb = min(cap, max(row_gran, _round_down(batch, row_gran)))
    if not multicore and bb > 128:
        bb = _round_down(bb, 128)                    # single-TC: clean 128-row MXU tiles
    if multicore and pl.cdiv(batch, bb) < 2:
        bb = max(row_gran, _round_up(pl.cdiv(batch, 2), row_gran))  # feed both TCs
    return bb


def gmm_policy_mlp_forward(x, hidden_weights, hidden_biases,
                           w_mean, b_mean, w_scale, b_scale, w_logits, b_logits,
                           *, num_modes, output_dim, min_std=1e-4,
                           mlp_activation='relu', std_activation='softplus',
                           low_noise_eval=True, training=False,
                           mxu_dtype=jnp.bfloat16, block_rows=None,
                           single_buffer_params=True):
    """Weights are stored pre-transposed: Linear(in,out) -> w of shape (in, out), b of (out,)."""
    assert len(hidden_weights) == len(hidden_biases) >= 1
    B, input_dim = x.shape
    num_layers = len(hidden_weights)
    num_dim = hidden_weights[0].shape[1]
    out_dim = num_modes * output_dim
    use_scale_head = not (low_noise_eval and not training)

    w_dtype = jnp.dtype(mxu_dtype) if mxu_dtype is not None else jnp.dtype(jnp.float32)
    row_gran = 16 if w_dtype == jnp.dtype(jnp.bfloat16) else 8
    usable_vmem, multicore = _tpu_generation()
    bb = int(block_rows) if block_rows else _pick_block_rows(
        B, multicore=multicore, row_gran=row_gran)
    grid = (pl.cdiv(B, bb),)

    # Fused head projection: [w_mean | w_scale | w_logits], zero-padded to a multiple of 128 lanes.
    if use_scale_head:
        w_heads = jnp.concatenate([w_mean, w_scale, w_logits], axis=1)
        b_heads = jnp.concatenate([b_mean, b_scale, b_logits], axis=0)
        logits_off = 2 * out_dim
    else:
        w_heads = jnp.concatenate([w_mean, w_logits], axis=1)
        b_heads = jnp.concatenate([b_mean, b_logits], axis=0)
        logits_off = out_dim
    n_heads = w_heads.shape[1]
    n_pad = _round_up(max(n_heads, 128), 128)
    if n_pad > n_heads:
        w_heads = jnp.pad(w_heads, ((0, 0), (0, n_pad - n_heads)))
        b_heads = jnp.pad(b_heads, ((0, n_pad - n_heads),))

    # Flat parameter list in kernel order; weights pre-cast to the MXU dtype (bf16 default),
    # biases kept in f32 (added onto the f32 accumulator).
    params = []
    for w, b in zip(hidden_weights, hidden_biases):
        params += [w.astype(w_dtype), b.astype(jnp.float32).reshape(1, -1)]
    params += [w_heads.astype(w_dtype), b_heads.astype(jnp.float32).reshape(1, -1)]

    x_spec = pl.BlockSpec((bb, input_dim), lambda i: (i, 0))
    out_spec = pl.BlockSpec((bb, n_pad), lambda i: (i, 0))      # single lane-dense output slab
    out_shape = jax.ShapeDtypeStruct((B, n_pad), x.dtype)

    # VMEM budget: resident weights (single or double buffered) + double-buffered I/O blocks
    # + a few live trunk-activation slabs.
    param_bytes = sum(int(p.size) * p.dtype.itemsize for p in params)
    io_itemsize = jnp.dtype(x.dtype).itemsize
    io_bytes = 2 * bb * (input_dim + n_pad) * io_itemsize
    act_bytes = 8 * bb * max(num_dim, n_pad) * 4

    kernel = functools.partial(
        _gmm_mlp_kernel, num_layers=num_layers, out_dim=out_dim, min_std=min_std,
        mlp_activation=mlp_activation, std_activation=std_activation,
        use_scale_head=use_scale_head, mxu_dtype=w_dtype)

    def _run(single_buffer):
        pbuf = 1 if single_buffer else 2
        vmem_limit = int(min(usable_vmem,
                             max(32 * 2 ** 20,
                                 pbuf * param_bytes + io_bytes + act_bytes + (4 << 20))))

        def param_spec(p):
            if single_buffer:
                # Constant index_map -> no prefetch needed; halve resident weight VMEM.
                return pl.BlockSpec(p.shape, lambda i: (0, 0),
                                    pipeline_mode=pl.Buffered(1))
            return pl.BlockSpec(p.shape, lambda i: (0, 0))

        return pl.pallas_call(
            kernel,
            out_shape=out_shape,
            grid_spec=pltpu.PrefetchScalarGridSpec(
                num_scalar_prefetch=0,
                grid=grid,
                in_specs=[x_spec] + [param_spec(p) for p in params],
                out_specs=out_spec),
            compiler_params=pltpu.CompilerParams(
                dimension_semantics=("parallel",),
                vmem_limit_bytes=vmem_limit),
        )(x, *params)

    if single_buffer_params and hasattr(pl, "Buffered"):
        try:
            packed_out = _run(True)
        except Exception:       # Buffered(1) unsupported in this jax build -> default buffering
            packed_out = _run(False)
    else:
        packed_out = _run(False)

    means = packed_out[:, :out_dim].reshape(B, num_modes, output_dim)
    logits = packed_out[:, logits_off:logits_off + num_modes]
    if use_scale_head:
        scales = packed_out[:, out_dim:2 * out_dim].reshape(B, num_modes, output_dim)
    else:
        # low_noise_eval & eval: scales = ones_like(means) * 1e-4 (no kernel work / writeback).
        scales = jnp.full((B, num_modes, output_dim), 1e-4, dtype=x.dtype)
    return means, scales, logits


def _reference(x, hidden_weights, hidden_biases, w_mean, b_mean, w_scale, b_scale,
               w_logits, b_logits, *, num_modes, output_dim, min_std,
               mlp_activation, std_activation, low_noise_eval, training,
               matmul_dtype=jnp.float32):
    # Pure-JAX mirror of GMMPolicyMLPLayer.forward (the tensors parameterizing the dist).
    def mm(a, w):
        return jnp.dot(a.astype(matmul_dtype), w.astype(matmul_dtype),
                       preferred_element_type=jnp.float32,
                       precision=jax.lax.Precision.HIGHEST)

    h = x
    for w, b in zip(hidden_weights, hidden_biases):
        h = mm(h, w) + b
        h = jnp.maximum(h, 0.0) if mlp_activation == 'relu' else jnp.where(h > 0, h, 0.01 * h)
    means = jnp.tanh(mm(h, w_mean) + b_mean).reshape(-1, num_modes, output_dim)
    logits = mm(h, w_logits) + b_logits
    if low_noise_eval and not training:
        scales = jnp.full_like(means, 1e-4)
    else:
        s = (mm(h, w_scale) + b_scale).reshape(-1, num_modes, output_dim)
        s = jax.nn.softplus(s) if std_activation == 'softplus' else jnp.exp(s)
        scales = s + min_std
    return means, scales, logits


if __name__ == "__main__":
    # Small shapes consistent with the module (scaled-down num_dim).
    B, input_dim, num_dim = 96, 32, 128
    num_layers = 2
    num_modes, output_dim = 5, 7
    min_std = 1e-4

    key = jax.random.PRNGKey(0)
    keys = jax.random.split(key, num_layers + 4)

    def linear_params(k, fan_in, fan_out):
        kw, kb = jax.random.split(k)
        bound = fan_in ** -0.5                      # PyTorch Linear default init scale
        w = jax.random.uniform(kw, (fan_in, fan_out), jnp.float32, -bound, bound)
        b = jax.random.uniform(kb, (fan_out,), jnp.float32, -bound, bound)
        return w, b

    x = jax.random.normal(keys[0], (B, input_dim), dtype=jnp.float32)

    hidden_weights, hidden_biases = [], []
    fan_in = input_dim
    for l in range(num_layers):
        w, b = linear_params(keys[1 + l], fan_in, num_dim)
        hidden_weights.append(w)
        hidden_biases.append(b)
        fan_in = num_dim

    w_mean, b_mean = linear_params(keys[num_layers + 1], num_dim, num_modes * output_dim)
    w_scale, b_scale = linear_params(keys[num_layers + 2], num_dim, num_modes * output_dim)
    w_logits, b_logits = linear_params(keys[num_layers + 3], num_dim, num_modes)

    common = dict(num_modes=num_modes, output_dim=output_dim, min_std=min_std,
                  mlp_activation='relu', std_activation='softplus', low_noise_eval=True)
    args = (x, hidden_weights, hidden_biases, w_mean, b_mean, w_scale, b_scale,
            w_logits, b_logits)

    # 1) Training path, f32 MXU, explicit small block_rows -> exercises the multi-step grid.
    m1, s1, l1 = jax.block_until_ready(gmm_policy_mlp_forward(
        *args, training=True, mxu_dtype=None, block_rows=32, **common))
    r1m, r1s, r1l = _reference(*args, training=True, matmul_dtype=jnp.float32, **common)
    assert m1.shape == (B, num_modes, output_dim) and s1.shape == m1.shape
    assert l1.shape == (B, num_modes)
    assert jnp.allclose(m1, r1m, atol=2e-2, rtol=2e-2), "means mismatch (f32 train path)"
    assert jnp.allclose(s1, r1s, atol=2e-2, rtol=2e-2), "scales mismatch (f32 train path)"
    assert jnp.allclose(l1, r1l, atol=2e-2, rtol=2e-2), "logits mismatch (f32 train path)"

    # 2) Training path, default bf16 MXU (f32 accumulation) vs a bf16-matched reference.
    m2, s2, l2 = jax.block_until_ready(gmm_policy_mlp_forward(
        *args, training=True, **common))
    r2m, r2s, r2l = _reference(*args, training=True, matmul_dtype=jnp.bfloat16, **common)
    assert jnp.allclose(m2, r2m, atol=2e-3, rtol=2e-3), "means mismatch (bf16 train path)"
    assert jnp.allclose(s2, r2s, atol=2e-3, rtol=2e-3), "scales mismatch (bf16 train path)"
    assert jnp.allclose(l2, r2l, atol=2e-3, rtol=2e-3), "logits mismatch (bf16 train path)"

    # 3) Eval path (low_noise_eval -> constant 1e-4 scales; scale head dropped from the kernel).
    m3, s3, l3 = jax.block_until_ready(gmm_policy_mlp_forward(
        *args, training=False, **common))
    r3m, r3s, r3l = _reference(*args, training=False, matmul_dtype=jnp.bfloat16, **common)
    assert jnp.allclose(m3, r3m, atol=2e-3, rtol=2e-3), "means mismatch (eval path)"
    assert jnp.allclose(s3, r3s), "scales mismatch (eval path)"
    assert jnp.allclose(l3, r3l, atol=2e-3, rtol=2e-3), "logits mismatch (eval path)"

    print("KERNEL_OK")
</pallas_src>

<mosaic_0001>
module attributes {stable_mosaic.version = 11 : i64} {
  func.func @_gmm_mlp_kernel(%arg0: i32, %arg1: memref<32x32xf32, #tpu.memory_space<vmem>>, %arg2: memref<32x128xf32, #tpu.memory_space<vmem>>, %arg3: memref<1x128xf32, #tpu.memory_space<vmem>>, %arg4: memref<128x128xf32, #tpu.memory_space<vmem>>, %arg5: memref<1x128xf32, #tpu.memory_space<vmem>>, %arg6: memref<128x128xf32, #tpu.memory_space<vmem>>, %arg7: memref<1x128xf32, #tpu.memory_space<vmem>>, %arg8: memref<32x128xf32, #tpu.memory_space<vmem>>) attributes {dimension_semantics = [#tpu.dimension_semantics<parallel>], iteration_bounds = array<i64: 3>, scalar_prefetch = 0 : i64, scratch_operands = 0 : i64, tpu.core_type = #tpu.core_type<tc>, window_params = [{transform_indices = @transform_0, window_bounds = array<i64: 32, 32>}, {pipeline_mode = #tpu.pipeline_mode<synchronous>, transform_indices = @transform_1, window_bounds = array<i64: 32, 128>}, {pipeline_mode = #tpu.pipeline_mode<synchronous>, transform_indices = @transform_2, window_bounds = array<i64: 1, 128>}, {pipeline_mode = #tpu.pipeline_mode<synchronous>, transform_indices = @transform_3, window_bounds = array<i64: 128, 128>}, {pipeline_mode = #tpu.pipeline_mode<synchronous>, transform_indices = @transform_4, window_bounds = array<i64: 1, 128>}, {pipeline_mode = #tpu.pipeline_mode<synchronous>, transform_indices = @transform_5, window_bounds = array<i64: 128, 128>}, {pipeline_mode = #tpu.pipeline_mode<synchronous>, transform_indices = @transform_6, window_bounds = array<i64: 1, 128>}, {transform_indices = @transform_7, window_bounds = array<i64: 32, 128>}]} {
    %c0 = arith.constant 0 : index
    %c0_0 = arith.constant 0 : index
    %0 = vector.load %arg1[%c0, %c0_0] : memref<32x32xf32, #tpu.memory_space<vmem>>, vector<32x32xf32>
    %c0_1 = arith.constant 0 : index
    %c0_2 = arith.constant 0 : index
    %1 = vector.load %arg2[%c0_1, %c0_2] : memref<32x128xf32, #tpu.memory_space<vmem>>, vector<32x128xf32>
    %cst = arith.constant dense<0.000000e+00> : vector<32x128xf32>
    %2 = tpu.matmul %0, %1, %cst {dimension_numbers = #tpu.dot_dimension_numbers<[1], [0], [0], [1], [0, 0, 1, 1], [], []>} : vector<32x32xf32>, vector<32x128xf32>, vector<32x128xf32> -> vector<32x128xf32>
    %c0_3 = arith.constant 0 : index
    %c0_4 = arith.constant 0 : index
    %3 = vector.load %arg3[%c0_3, %c0_4] : memref<1x128xf32, #tpu.memory_space<vmem>>, vector<1x128xf32>
    %4 = vector.broadcast %3 : vector<1x128xf32> to vector<32x128xf32>
    %5 = arith.addf %2, %4 : vector<32x128xf32>
    %cst_5 = arith.constant 0.000000e+00 : f32
    %6 = vector.broadcast %cst_5 : f32 to vector<32x128xf32>
    %7 = arith.maximumf %5, %6 : vector<32x128xf32>
    %c0_6 = arith.constant 0 : index
    %c0_7 = arith.constant 0 : index
    %8 = vector.load %arg4[%c0_6, %c0_7] : memref<128x128xf32, #tpu.memory_space<vmem>>, vector<128x128xf32>
    %cst_8 = arith.constant dense<0.000000e+00> : vector<32x128xf32>
    %9 = tpu.matmul %7, %8, %cst_8 {dimension_numbers = #tpu.dot_dimension_numbers<[1], [0], [0], [1], [0, 0, 1, 1], [], []>} : vector<32x128xf32>, vector<128x128xf32>, vector<32x128xf32> -> vector<32x128xf32>
    %c0_9 = arith.constant 0 : index
    %c0_10 = arith.constant 0 : index
    %10 = vector.load %arg5[%c0_9, %c0_10] : memref<1x128xf32, #tpu.memory_space<vmem>>, vector<1x128xf32>
    %11 = vector.broadcast %10 : vector<1x128xf32> to vector<32x128xf32>
    %12 = arith.addf %9, %11 : vector<32x128xf32>
    %cst_11 = arith.constant 0.000000e+00 : f32
    %13 = vector.broadcast %cst_11 : f32 to vector<32x128xf32>
    %14 = arith.maximumf %12, %13 : vector<32x128xf32>
    %c0_12 = arith.constant 0 : index
    %c0_13 = arith.constant 0 : index
    %15 = vector.load %arg6[%c0_12, %c0_13] : memref<128x128xf32, #tpu.memory_space<vmem>>, vector<128x128xf32>
    %cst_14 = arith.constant dense<0.000000e+00> : vector<32x128xf32>
    %16 = tpu.matmul %14, %15, %cst_14 {dimension_numbers = #tpu.dot_dimension_numbers<[1], [0], [0], [1], [0, 0, 1, 1], [], []>} : vector<32x128xf32>, vector<128x128xf32>, vector<32x128xf32> -> vector<32x128xf32>
    %c0_15 = arith.constant 0 : index
    %c0_16 = arith.constant 0 : index
    %17 = vector.load %arg7[%c0_15, %c0_16] : memref<1x128xf32, #tpu.memory_space<vmem>>, vector<1x128xf32>
    %18 = vector.broadcast %17 : vector<1x128xf32> to vector<32x128xf32>
    %19 = arith.addf %16, %18 : vector<32x128xf32>
    %20 = tpu.iota {dimensions = array<i32: 1>} : vector<32x128xi32>
    %21 = math.tanh %19 : vector<32x128xf32>
    %cst_17 = arith.constant 0.000000e+00 : f32
    %22 = vector.broadcast %cst_17 : f32 to vector<32x128xf32>
    %23 = arith.maximumf %19, %22 : vector<32x128xf32>
    %24 = math.absf %19 : vector<32x128xf32>
    %cst_18 = arith.constant 0.000000e+00 : f32
    %25 = vector.broadcast %cst_18 : f32 to vector<32x128xf32>
    %26 = arith.subf %25, %24 : vector<32x128xf32>
    %27 = math.exp %26 : vector<32x128xf32>
    %cst_19 = arith.constant 1.000000e+00 : f32
    %28 = vector.broadcast %cst_19 : f32 to vector<32x128xf32>
    %29 = arith.addf %28, %27 : vector<32x128xf32>
    %30 = math.log %29 : vector<32x128xf32>
    %31 = arith.addf %23, %30 : vector<32x128xf32>
    %cst_20 = arith.constant 9.99999974E-5 : f32
    %32 = vector.broadcast %cst_20 : f32 to vector<32x128xf32>
    %33 = arith.addf %31, %32 : vector<32x128xf32>
    %c35_i32 = arith.constant 35 : i32
    %34 = vector.broadcast %c35_i32 : i32 to vector<32x128xi32>
    %35 = arith.cmpi slt, %20, %34 : vector<32x128xi32>
    %c70_i32 = arith.constant 70 : i32
    %36 = vector.broadcast %c70_i32 : i32 to vector<32x128xi32>
    %37 = arith.cmpi slt, %20, %36 : vector<32x128xi32>
    %38 = arith.select %37, %33, %19 : vector<32x128xi1>, vector<32x128xf32>
    %39 = arith.select %35, %21, %38 : vector<32x128xi1>, vector<32x128xf32>
    %c0_21 = arith.constant 0 : index
    %c0_22 = arith.constant 0 : index
    %40 = vector.load %arg8[%c0_21, %c0_22] : memref<32x128xf32, #tpu.memory_space<vmem>>, vector<32x128xf32>
    tpu.vector_store %arg8[%c0_21, %c0_22], %39 {strides = array<i32>} : memref<32x128xf32, #tpu.memory_space<vmem>>, vector<32x128xf32>,
    return
  }
  func.func @transform_0(%arg0: i32) -> (i32, i32) {
    %c0_i32 = arith.constant 0 : i32
    %c0_i32_0 = arith.constant 0 : i32
    return %arg0, %c0_i32 : i32, i32
  }
  func.func @transform_1(%arg0: i32) -> (i32, i32) {
    %c0_i32 = arith.constant 0 : i32
    %c0_i32_0 = arith.constant 0 : i32
    %c0_i32_1 = arith.constant 0 : i32
    return %c0_i32, %c0_i32_0 : i32, i32
  }
  func.func @transform_2(%arg0: i32) -> (i32, i32) {
    %c0_i32 = arith.constant 0 : i32
    %c0_i32_0 = arith.constant 0 : i32
    %c0_i32_1 = arith.constant 0 : i32
    return %c0_i32, %c0_i32_0 : i32, i32
  }
  func.func @transform_3(%arg0: i32) -> (i32, i32) {
    %c0_i32 = arith.constant 0 : i32
    %c0_i32_0 = arith.constant 0 : i32
    %c0_i32_1 = arith.constant 0 : i32
    return %c0_i32, %c0_i32_0 : i32, i32
  }
  func.func @transform_4(%arg0: i32) -> (i32, i32) {
    %c0_i32 = arith.constant 0 : i32
    %c0_i32_0 = arith.constant 0 : i32
    %c0_i32_1 = arith.constant 0 : i32
    return %c0_i32, %c0_i32_0 : i32, i32
  }
  func.func @transform_5(%arg0: i32) -> (i32, i32) {
    %c0_i32 = arith.constant 0 : i32
    %c0_i32_0 = arith.constant 0 : i32
    %c0_i32_1 = arith.constant 0 : i32
    return %c0_i32, %c0_i32_0 : i32, i32
  }
  func.func @transform_6(%arg0: i32) -> (i32, i32) {
    %c0_i32 = arith.constant 0 : i32
    %c0_i32_0 = arith.constant 0 : i32
    %c0_i32_1 = arith.constant 0 : i32
    return %c0_i32, %c0_i32_0 : i32, i32
  }
  func.func @transform_7(%arg0: i32) -> (i32, i32) {
    %c0_i32 = arith.constant 0 : i32
    %c0_i32_0 = arith.constant 0 : i32
    return %arg0, %c0_i32 : i32, i32
  }
}

module attributes {stable_mosaic.version = 11 : i64} {
  func.func @_gmm_mlp_kernel(%arg0: i32, %arg1: memref<32x32xf32, #tpu.memory_space<vmem>>, %arg2: memref<32x128xf32, #tpu.memory_space<vmem>>, %arg3: memref<1x128xf32, #tpu.memory_space<vmem>>, %arg4: memref<128x128xf32, #tpu.memory_space<vmem>>, %arg5: memref<1x128xf32, #tpu.memory_space<vmem>>, %arg6: memref<128x128xf32, #tpu.memory_space<vmem>>, %arg7: memref<1x128xf32, #tpu.memory_space<vmem>>, %arg8: memref<32x128xf32, #tpu.memory_space<vmem>>) attributes {dimension_semantics = [#tpu.dimension_semantics<parallel>], iteration_bounds = array<i64: 3>, scalar_prefetch = 0 : i64, scratch_operands = 0 : i64, tpu.core_type = #tpu.core_type<tc>, window_params = [{transform_indices = @transform_0, window_bounds = array<i64: 32, 32>}, {pipeline_mode = #tpu.pipeline_mode<synchronous>, transform_indices = @transform_1, window_bounds = array<i64: 32, 128>}, {pipeline_mode = #tpu.pipeline_mode<synchronous>, transform_indices = @transform_2, window_bounds = array<i64: 1, 128>}, {pipeline_mode = #tpu.pipeline_mode<synchronous>, transform_indices = @transform_3, window_bounds = array<i64: 128, 128>}, {pipeline_mode = #tpu.pipeline_mode<synchronous>, transform_indices = @transform_4, window_bounds = array<i64: 1, 128>}, {pipeline_mode = #tpu.pipeline_mode<synchronous>, transform_indices = @transform_5, window_bounds = array<i64: 128, 128>}, {pipeline_mode = #tpu.pipeline_mode<synchronous>, transform_indices = @transform_6, window_bounds = array<i64: 1, 128>}, {transform_indices = @transform_7, window_bounds = array<i64: 32, 128>}]} {
    %c0 = arith.constant 0 : index
    %c0_0 = arith.constant 0 : index
    %0 = vector.load %arg1[%c0, %c0_0] : memref<32x32xf32, #tpu.memory_space<vmem>>, vector<32x32xf32>
    %c0_1 = arith.constant 0 : index
    %c0_2 = arith.constant 0 : index
    %1 = vector.load %arg2[%c0_1, %c0_2] : memref<32x128xf32, #tpu.memory_space<vmem>>, vector<32x128xf32>
    %cst = arith.constant dense<0.000000e+00> : vector<32x128xf32>
    %2 = tpu.matmul %0, %1, %cst {dimension_numbers = #tpu.dot_dimension_numbers<[1], [0], [0], [1], [0, 0, 1, 1], [], []>} : vector<32x32xf32>, vector<32x128xf32>, vector<32x128xf32> -> vector<32x128xf32>
    %c0_3 = arith.constant 0 : index
    %c0_4 = arith.constant 0 : index
    %3 = vector.load %arg3[%c0_3, %c0_4] : memref<1x128xf32, #tpu.memory_space<vmem>>, vector<1x128xf32>
    %4 = vector.broadcast %3 : vector<1x128xf32> to vector<32x128xf32>
    %5 = arith.addf %2, %4 : vector<32x128xf32>
    %cst_5 = arith.constant 0.000000e+00 : f32
    %6 = vector.broadcast %cst_5 : f32 to vector<32x128xf32>
    %7 = arith.maximumf %5, %6 : vector<32x128xf32>
    %c0_6 = arith.constant 0 : index
    %c0_7 = arith.constant 0 : index
    %8 = vector.load %arg4[%c0_6, %c0_7] : memref<128x128xf32, #tpu.memory_space<vmem>>, vector<128x128xf32>
    %cst_8 = arith.constant dense<0.000000e+00> : vector<32x128xf32>
    %9 = tpu.matmul %7, %8, %cst_8 {dimension_numbers = #tpu.dot_dimension_numbers<[1], [0], [0], [1], [0, 0, 1, 1], [], []>} : vector<32x128xf32>, vector<128x128xf32>, vector<32x128xf32> -> vector<32x128xf32>
    %c0_9 = arith.constant 0 : index
    %c0_10 = arith.constant 0 : index
    %10 = vector.load %arg5[%c0_9, %c0_10] : memref<1x128xf32, #tpu.memory_space<vmem>>, vector<1x128xf32>
    %11 = vector.broadcast %10 : vector<1x128xf32> to vector<32x128xf32>
    %12 = arith.addf %9, %11 : vector<32x128xf32>
    %cst_11 = arith.constant 0.000000e+00 : f32
    %13 = vector.broadcast %cst_11 : f32 to vector<32x128xf32>
    %14 = arith.maximumf %12, %13 : vector<32x128xf32>
    %c0_12 = arith.constant 0 : index
    %c0_13 = arith.constant 0 : index
    %15 = vector.load %arg6[%c0_12, %c0_13] : memref<128x128xf32, #tpu.memory_space<vmem>>, vector<128x128xf32>
    %cst_14 = arith.constant dense<0.000000e+00> : vector<32x128xf32>
    %16 = tpu.matmul %14, %15, %cst_14 {dimension_numbers = #tpu.dot_dimension_numbers<[1], [0], [0], [1], [0, 0, 1, 1], [], []>} : vector<32x128xf32>, vector<128x128xf32>, vector<32x128xf32> -> vector<32x128xf32>
    %c0_15 = arith.constant 0 : index
    %c0_16 = arith.constant 0 : index
    %17 = vector.load %arg7[%c0_15, %c0_16] : memref<1x128xf32, #tpu.memory_space<vmem>>, vector<1x128xf32>
    %18 = vector.broadcast %17 : vector<1x128xf32> to vector<32x128xf32>
    %19 = arith.addf %16, %18 : vector<32x128xf32>
    %20 = tpu.iota {dimensions = array<i32: 1>} : vector<32x128xi32>
    %21 = math.tanh %19 : vector<32x128xf32>
    %cst_17 = arith.constant 0.000000e+00 : f32
    %22 = vector.broadcast %cst_17 : f32 to vector<32x128xf32>
    %23 = arith.maximumf %19, %22 : vector<32x128xf32>
    %24 = math.absf %19 : vector<32x128xf32>
    %cst_18 = arith.constant 0.000000e+00 : f32
    %25 = vector.broadcast %cst_18 : f32 to vector<32x128xf32>
    %26 = arith.subf %25, %24 : vector<32x128xf32>
    %27 = math.exp %26 : vector<32x128xf32>
    %cst_19 = arith.constant 1.000000e+00 : f32
    %28 = vector.broadcast %cst_19 : f32 to vector<32x128xf32>
    %29 = arith.addf %28, %27 : vector<32x128xf32>
    %30 = math.log %29 : vector<32x128xf32>
    %31 = arith.addf %23, %30 : vector<32x128xf32>
    %cst_20 = arith.constant 9.99999974E-5 : f32
    %32 = vector.broadcast %cst_20 : f32 to vector<32x128xf32>
    %33 = arith.addf %31, %32 : vector<32x128xf32>
    %c35_i32 = arith.constant 35 : i32
    %34 = vector.broadcast %c35_i32 : i32 to vector<32x128xi32>
    %35 = arith.cmpi slt, %20, %34 : vector<32x128xi32>
    %c70_i32 = arith.constant 70 : i32
    %36 = vector.broadcast %c70_i32 : i32 to vector<32x128xi32>
    %37 = arith.cmpi slt, %20, %36 : vector<32x128xi32>
    %38 = arith.select %37, %33, %19 : vector<32x128xi1>, vector<32x128xf32>
    %39 = arith.select %35, %21, %38 : vector<32x128xi1>, vector<32x128xf32>
    %c0_21 = arith.constant 0 : index
    %c0_22 = arith.constant 0 : index
    %40 = vector.load %arg8[%c0_21, %c0_22] : memref<32x128xf32, #tpu.memory_space<vmem>>, vector<32x128xf32>
    tpu.vector_store %arg8[%c0_21, %c0_22], %39 {strides = array<i32>} : memref<32x128xf32, #tpu.memory_space<vmem>>, vector<32x128xf32>,
    return
  }
  func.func @transform_0(%arg0: i32) -> (i32, i32) {
    %c0_i32 = arith.constant 0 : i32
    %c0_i32_0 = arith.constant 0 : i32
    return %arg0, %c0_i32 : i32, i32
  }
  func.func @transform_1(%arg0: i32) -> (i32, i32) {
    %c0_i32 = arith.constant 0 : i32
    %c0_i32_0 = arith.constant 0 : i32
    %c0_i32_1 = arith.constant 0 : i32
    return %c0_i32, %c0_i32_0 : i32, i32
  }
  func.func @transform_2(%arg0: i32) -> (i32, i32) {
    %c0_i32 = arith.constant 0 : i32
    %c0_i32_0 = arith.constant 0 : i32
    %c0_i32_1 = arith.constant 0 : i32
    return %c0_i32, %c0_i32_0 : i32, i32
  }
  func.func @transform_3(%arg0: i32) -> (i32, i32) {
    %c0_i32 = arith.constant 0 : i32
    %c0_i32_0 = arith.constant 0 : i32
    %c0_i32_1 = arith.constant 0 : i32
    return %c0_i32, %c0_i32_0 : i32, i32
  }
  func.func @transform_4(%arg0: i32) -> (i32, i32) {
    %c0_i32 = arith.constant 0 : i32
    %c0_i32_0 = arith.constant 0 : i32
    %c0_i32_1 = arith.constant 0 : i32
    return %c0_i32, %c0_i32_0 : i32, i32
  }
  func.func @transform_5(%arg0: i32) -> (i32, i32) {
    %c0_i32 = arith.constant 0 : i32
    %c0_i32_0 = arith.constant 0 : i32
    %c0_i32_1 = arith.constant 0 : i32
    return %c0_i32, %c0_i32_0 : i32, i32
  }
  func.func @transform_6(%arg0: i32) -> (i32, i32) {
    %c0_i32 = arith.constant 0 : i32
    %c0_i32_0 = arith.constant 0 : i32
    %c0_i32_1 = arith.constant 0 : i32
    return %c0_i32, %c0_i32_0 : i32, i32
  }
  func.func @transform_7(%arg0: i32) -> (i32, i32) {
    %c0_i32 = arith.constant 0 : i32
    %c0_i32_0 = arith.constant 0 : i32
    return %arg0, %c0_i32 : i32, i32
  }
}

</mosaic_0001>

<llo_original>
// kernel: tpu_custom_call.1
$region0: #{tpu_custom_call.1}
  #allocation0 [shape = 'u32[]', space=smem, size = 0x4, offset = 0x4, fixed_abs, tag = 'smem constant byte address 0x4 - core index']
  #allocation1 [shape = 'u32[144,128]{1,0:T(1,128)}', space=vmem, size = 0x12000, scoped, tag = 'internal scratch']
  %s0 = inlined_call_operand.vmem [shape: f32[96,32], index: 0, kind: input, shape index: {}]
  %s1 = inlined_call_operand.hbm [shape: f32[32,128], index: 1, kind: input, shape index: {}]
  %s2 = inlined_call_operand.vmem [shape: f32[1,128], index: 2, kind: input, shape index: {}]
  %s3 = inlined_call_operand.vmem [shape: f32[128,128], index: 3, kind: input, shape index: {}]
  %s4 = inlined_call_operand.vmem [shape: f32[1,128], index: 4, kind: input, shape index: {}]
  %s5 = inlined_call_operand.hbm [shape: f32[128,128], index: 5, kind: input, shape index: {}]
  %s6 = inlined_call_operand.vmem [shape: f32[1,128], index: 6, kind: input, shape index: {}]
  %s7 = inlined_call_operand.hbm [shape: f32[96,128], index: 7, kind: output, shape index: {}]
  %s8 = sld [smem:[#allocation0]]
  $region69: #{tpu_custom_call.1} parent=0
    _
  %s10 = ssub.s32 1, %s8
  %s11 = scalar_select 0, %s10, %s8
  $region1: #{tpu_custom_call.1} parent=0
    #allocation2 [shape = 'u8[16384]{0}', space=vmem, size = 0x4000, scoped, tag = 'input window, operand 1, single buffered']
    #allocation3 [shape = 's32[2]{0}', space=sflag, size = 0x8, scoped, tag = 'scoped memory for tpu_custom_call.1']
    #allocation4 [shape = 's32[2]{0}', space=sflag, size = 0x8, scoped, tag = 'scoped memory for tpu_custom_call.1']
    #allocation5 [shape = 'u8[65536]{0}', space=vmem, size = 0x10000, scoped, tag = 'input window, operand 5, single buffered']
    #allocation6 [shape = 's32[1]{0}', space=sflag, size = 0x4, scoped, tag = 'scoped memory for tpu_custom_call.1']
    #allocation7 [shape = 'u8[32768]{0}', space=vmem, size = 0x8000, scoped, tag = 'output window, operand 0']
    %12 = vsyncpa [#allocation3], 0
    %13 = vsyncpa [#allocation6], 0
    %14 = vsyncpa [#allocation4], 0
    %s15 = scalar_lea.sflag [#allocation4], 1
    %16 = vsyncpa %s15, 0
    loop: start=0, step=1, limit=5
    $region2: #{tpu_custom_call.1} parent=1 // loop_pre_header
      _
    $region3: #{tpu_custom_call.1} parent=1 // loop_header
      %s18 = sphi 0, %s22
      %p19 = scmp.ge.s32.totalorder %s18, 5
      %s28 = sphi 0, %s30
      %s31 = sphi 0, %s28
      %s32 = sphi 0, %s31
      %s48 = sphi 0, %s32
      %s52 = sphi 0, %s52
      %s54 = sphi 0, %s52
      %s55 = sphi 0, %s54
      %s69 = sphi 0, %s55
      %s73 = sphi 0, %s73
      %s75 = sphi 0, %s73
      %s76 = sphi 0, %s75
      %s90 = sphi 0, %s76
      %s94 = sphi 0, %s94
      %s96 = sphi 0, %s94
      %s97 = sphi 0, %s96
      %s111 = sphi 0, %s97
      %s115 = sphi 0, %s115
      %s117 = sphi 0, %s115
      %s118 = sphi 0, %s117
      %s132 = sphi 0, %s118
      %s136 = sphi 0, %s136
      %s138 = sphi 0, %s136
      %s139 = sphi 0, %s138
      %s153 = sphi 0, %s139
      %s157 = sphi 0, %s157
      %s159 = sphi 0, %s157
      %s160 = sphi 0, %s159
      %s174 = sphi 0, %s160
      %s180 = sphi 0, %s182
      %s183 = sphi 0, %s180
      %s184 = sphi 0, %s183
      %s200 = sphi 0, %s184
    $region4: #{tpu_custom_call.1} parent=1 // loop_header_branch
      %21 = sbr.rel (%p19) target = $region8
    $region5: #{tpu_custom_call.1} parent=1 // loop_body
      %s23 = ssub.s32 %s18, 1
      %s24 = ssub.s32 %s18, 2
      %s25 = sadd.s32 %s18, 1
      %s26 = ssub.s32 %s18, %s25
      %p27 = scmp.eq.s32.totalorder %s26, 0
      %s29 = sadd.s32 %s28, 1
      %s30 = scalar_select %p27, %s28, %s29
      %p33 = pneg %p27
      %p34 = scmp.eq.s32.totalorder %s18, 2
      %p35 = por %p33, %p34
      %p36 = scmp.ne.s32.totalorder %s28, %s31
      %p37 = scmp.eq.s32.totalorder %s18, 0
      %p38 = por %p36, %p37
      %p39 = scmp.ne.s32.totalorder %s28, %s31
      %p40 = scmp.eq.s32.totalorder %s23, 2
      %p41 = por %p39, %p40
      %p42 = scmp.ne.s32.totalorder %s31, %s32
      %p43 = scmp.eq.s32.totalorder %s23, 0
      %p44 = por %p42, %p43
      %p45 = scmp.ne.s32.totalorder %s31, %s32
      %p46 = scmp.eq.s32.totalorder %s24, 2
      %p47 = por %p45, %p46
      %p49 = scmp.ne.s32.totalorder %s32, %s48
      %p50 = scmp.eq.s32.totalorder %s24, 0
      %p51 = por %p49, %p50
      %s53 = sadd.s32 %s52, 1
      %p56 = scmp.eq.s32.totalorder %s18, 2
      %p57 = scmp.ne.s32.totalorder %s52, %s54
      %p58 = scmp.eq.s32.totalorder %s18, 0
      %p59 = por %p57, %p58
      %p60 = scmp.ne.s32.totalorder %s52, %s54
      %p61 = scmp.eq.s32.totalorder %s23, 2
      %p62 = por %p60, %p61
      %p63 = scmp.ne.s32.totalorder %s54, %s55
      %p64 = scmp.eq.s32.totalorder %s23, 0
      %p65 = por %p63, %p64
      %p66 = scmp.ne.s32.totalorder %s54, %s55
      %p67 = scmp.eq.s32.totalorder %s24, 2
      %p68 = por %p66, %p67
      %p70 = scmp.ne.s32.totalorder %s55, %s69
      %p71 = scmp.eq.s32.totalorder %s24, 0
      %p72 = por %p70, %p71
      %s74 = sadd.s32 %s73, 1
      %p77 = scmp.eq.s32.totalorder %s18, 2
      %p78 = scmp.ne.s32.totalorder %s73, %s75
      %p79 = scmp.eq.s32.totalorder %s18, 0
      %p80 = por %p78, %p79
      %p81 = scmp.ne.s32.totalorder %s73, %s75
      %p82 = scmp.eq.s32.totalorder %s23, 2
      %p83 = por %p81, %p82
      %p84 = scmp.ne.s32.totalorder %s75, %s76
      %p85 = scmp.eq.s32.totalorder %s23, 0
      %p86 = por %p84, %p85
      %p87 = scmp.ne.s32.totalorder %s75, %s76
      %p88 = scmp.eq.s32.totalorder %s24, 2
      %p89 = por %p87, %p88
      %p91 = scmp.ne.s32.totalorder %s76, %s90
      %p92 = scmp.eq.s32.totalorder %s24, 0
      %p93 = por %p91, %p92
      %s95 = sadd.s32 %s94, 1
      %p98 = scmp.eq.s32.totalorder %s18, 2
      %p99 = scmp.ne.s32.totalorder %s94, %s96
      %p100 = scmp.eq.s32.totalorder %s18, 0
      %p101 = por %p99, %p100
      %p102 = scmp.ne.s32.totalorder %s94, %s96
      %p103 = scmp.eq.s32.totalorder %s23, 2
      %p104 = por %p102, %p103
      %p105 = scmp.ne.s32.totalorder %s96, %s97
      %p106 = scmp.eq.s32.totalorder %s23, 0
      %p107 = por %p105, %p106
      %p108 = scmp.ne.s32.totalorder %s96, %s97
      %p109 = scmp.eq.s32.totalorder %s24, 2
      %p110 = por %p108, %p109
      %p112 = scmp.ne.s32.totalorder %s97, %s111
      %p113 = scmp.eq.s32.totalorder %s24, 0
      %p114 = por %p112, %p113
      %s116 = sadd.s32 %s115, 1
      %p119 = scmp.eq.s32.totalorder %s18, 2
      %p120 = scmp.ne.s32.totalorder %s115, %s117
      %p121 = scmp.eq.s32.totalorder %s18, 0
      %p122 = por %p120, %p121
      %p123 = scmp.ne.s32.totalorder %s115, %s117
      %p124 = scmp.eq.s32.totalorder %s23, 2
      %p125 = por %p123, %p124
      %p126 = scmp.ne.s32.totalorder %s117, %s118
      %p127 = scmp.eq.s32.totalorder %s23, 0
      %p128 = por %p126, %p127
      %p129 = scmp.ne.s32.totalorder %s117, %s118
      %p130 = scmp.eq.s32.totalorder %s24, 2
      %p131 = por %p129, %p130
      %p133 = scmp.ne.s32.totalorder %s118, %s132
      %p134 = scmp.eq.s32.totalorder %s24, 0
      %p135 = por %p133, %p134
      %s137 = sadd.s32 %s136, 1
      %p140 = scmp.eq.s32.totalorder %s18, 2
      %p141 = scmp.ne.s32.totalorder %s136, %s138
      %p142 = scmp.eq.s32.totalorder %s18, 0
      %p143 = por %p141, %p142
      %p144 = scmp.ne.s32.totalorder %s136, %s138
      %p145 = scmp.eq.s32.totalorder %s23, 2
      %p146 = por %p144, %p145
      %p147 = scmp.ne.s32.totalorder %s138, %s139
      %p148 = scmp.eq.s32.totalorder %s23, 0
      %p149 = por %p147, %p148
      %p150 = scmp.ne.s32.totalorder %s138, %s139
      %p151 = scmp.eq.s32.totalorder %s24, 2
      %p152 = por %p150, %p151
      %p154 = scmp.ne.s32.totalorder %s139, %s153
      %p155 = scmp.eq.s32.totalorder %s24, 0
      %p156 = por %p154, %p155
      %s158 = sadd.s32 %s157, 1
      %p161 = scmp.eq.s32.totalorder %s18, 2
      %p162 = scmp.ne.s32.totalorder %s157, %s159
      %p163 = scmp.eq.s32.totalorder %s18, 0
      %p164 = por %p162, %p163
      %p165 = scmp.ne.s32.totalorder %s157, %s159
      %p166 = scmp.eq.s32.totalorder %s23, 2
      %p167 = por %p165, %p166
      %p168 = scmp.ne.s32.totalorder %s159, %s160
      %p169 = scmp.eq.s32.totalorder %s23, 0
      %p170 = por %p168, %p169
      %p171 = scmp.ne.s32.totalorder %s159, %s160
      %p172 = scmp.eq.s32.totalorder %s24, 2
      %p173 = por %p171, %p172
      %p175 = scmp.ne.s32.totalorder %s160, %s174
      %p176 = scmp.eq.s32.totalorder %s24, 0
      %p177 = por %p175, %p176
      %s178 = ssub.s32 %s18, %s25
      %p179 = scmp.eq.s32.totalorder %s178, 0
      %s181 = sadd.s32 %s180, 1
      %s182 = scalar_select %p179, %s180, %s181
      %p185 = pneg %p179
      %p186 = scmp.eq.s32.totalorder %s18, 2
      %p187 = por %p185, %p186
      %p188 = scmp.ne.s32.totalorder %s180, %s183
      %p189 = scmp.eq.s32.totalorder %s18, 0
      %p190 = por %p188, %p189
      %p191 = scmp.ne.s32.totalorder %s180, %s183
      %p192 = scmp.eq.s32.totalorder %s23, 2
      %p193 = por %p191, %p192
      %p194 = scmp.ne.s32.totalorder %s183, %s184
      %p195 = scmp.eq.s32.totalorder %s23, 0
      %p196 = por %p194, %p195
      %p197 = scmp.ne.s32.totalorder %s183, %s184
      %p198 = scmp.eq.s32.totalorder %s24, 2
      %p199 = por %p197, %p198
      %p201 = scmp.ne.s32.totalorder %s184, %s200
      %p202 = scmp.eq.s32.totalorder %s24, 0
      %p203 = por %p201, %p202
      %p204 = scmp.le.s32.totalorder 1, %s18
      %p205 = scmp.lt.s32.totalorder %s18, 4
      %p206 = pnand %p204, %p205
      %p207 = pneg %p206
      // Predicated region
      $region9: #{tpu_custom_call.1} parent=5 // pred_check
        _
      $region10: #{tpu_custom_call.1} parent=5 // pred_check_branch
        %209 = sbr.rel (%p206) target = $region12
      $region11: #{tpu_custom_call.1} parent=5 // pred_region
        %s210 = ssub.s32 %s18, 1
        // Predicated region
        $region13: #{tpu_custom_call.1} parent=11 // pred_check
          %p211 = pneg %p65
        $region14: #{tpu_custom_call.1} parent=11 // pred_check_branch
          %213 = sbr.rel (%p211) target = $region16
        $region15: #{tpu_custom_call.1} parent=11 // pred_region
          %s215 = ssub.s32 512, 512
          %216 = vsyncadd [#allocation3], %s215
          %s217 = sshll.u32 [#allocation2], 4
          %s218 = int_to_ptr.vmem [resolvable:$true] %s217
          %223 = dma.hbm_to_vmem [thread:$0]  %s1, 512, %s218, [#allocation3], 128, 128, 8
        $region16: #{tpu_custom_call.1} parent=11 // pred_fallthru
          _
        // Predicated region
        $region17: #{tpu_custom_call.1} parent=11 // pred_check
          %p224 = pneg %p86
        $region18: #{tpu_custom_call.1} parent=11 // pred_check_branch
          %226 = sbr.rel (%p224) target = $region20
        $region19: #{tpu_custom_call.1} parent=11 // pred_region
          _
        $region20: #{tpu_custom_call.1} parent=11 // pred_fallthru
          _
        // Predicated region
        $region21: #{tpu_custom_call.1} parent=11 // pred_check
          %p227 = pneg %p107
        $region22: #{tpu_custom_call.1} parent=11 // pred_check_branch
          %229 = sbr.rel (%p227) target = $region24
        $region23: #{tpu_custom_call.1} parent=11 // pred_region
          _
        $region24: #{tpu_custom_call.1} parent=11 // pred_fallthru
          _
        // Predicated region
        $region25: #{tpu_custom_call.1} parent=11 // pred_check
          %p230 = pneg %p128
        $region26: #{tpu_custom_call.1} parent=11 // pred_check_branch
          %232 = sbr.rel (%p230) target = $region28
        $region27: #{tpu_custom_call.1} parent=11 // pred_region
          _
        $region28: #{tpu_custom_call.1} parent=11 // pred_fallthru
          _
        // Predicated region
        $region29: #{tpu_custom_call.1} parent=11 // pred_check
          %p233 = pneg %p149
        $region30: #{tpu_custom_call.1} parent=11 // pred_check_branch
          %235 = sbr.rel (%p233) target = $region32
        $region31: #{tpu_custom_call.1} parent=11 // pred_region
          %s237 = ssub.s32 2048, 2048
          %238 = vsyncadd [#allocation6], %s237
          %s239 = sshll.u32 [#allocation5], 4
          %s240 = int_to_ptr.vmem [resolvable:$true] %s239
          %245 = dma.hbm_to_vmem [thread:$0]  %s5, 2048, %s240, [#allocation6], 128, 128, 8
        $region32: #{tpu_custom_call.1} parent=11 // pred_fallthru
          _
        // Predicated region
        $region33: #{tpu_custom_call.1} parent=11 // pred_check
          %p246 = pneg %p170
        $region34: #{tpu_custom_call.1} parent=11 // pred_check_branch
          %248 = sbr.rel (%p246) target = $region36
        $region35: #{tpu_custom_call.1} parent=11 // pred_region
          _
        $region36: #{tpu_custom_call.1} parent=11 // pred_fallthru
          _
      $region12: #{tpu_custom_call.1} parent=5 // pred_fallthru
        _
      %p249 = scmp.lt.s32.totalorder %s18, 3
      // Predicated region
      $region37: #{tpu_custom_call.1} parent=5 // pred_check
        %p250 = pneg %p249
      $region38: #{tpu_custom_call.1} parent=5 // pred_check_branch
        %252 = sbr.rel (%p250) target = $region40
      $region39: #{tpu_custom_call.1} parent=5 // pred_region
        // Predicated region
        $region41: #{tpu_custom_call.1} parent=39 // pred_check
          %p253 = pneg %p38
        $region42: #{tpu_custom_call.1} parent=39 // pred_check_branch
          %255 = sbr.rel (%p253) target = $region44
        $region43: #{tpu_custom_call.1} parent=39 // pred_region
          %s256 = smul.u32 4, %s18
          %p257 = scmp.lt.s32.totalorder %s256, 11
          %s258 = scalar_select %p257, %s256, 11
          %s259 = smul.addr %s258, 8
          %s260 = scalar_lea.vmem %s0, %s259
          %s261 = smul.u32 4, %s18
        $region44: #{tpu_custom_call.1} parent=39 // pred_fallthru
          _
      $region40: #{tpu_custom_call.1} parent=5 // pred_fallthru
        _
      %p262 = scmp.le.s32.totalorder 1, %s18
      %p263 = scmp.lt.s32.totalorder %s18, 4
      %p264 = pnand %p262, %p263
      %p265 = pneg %p264
      // Predicated region
      $region45: #{tpu_custom_call.1} parent=5 // pred_check
        _
      $region46: #{tpu_custom_call.1} parent=5 // pred_check_branch
        %267 = sbr.rel (%p264) target = $region48
      $region47: #{tpu_custom_call.1} parent=5 // pred_region
        %s268 = ssub.s32 %s18, 1
        // Predicated region
        $region49: #{tpu_custom_call.1} parent=47 // pred_check
          %p269 = pneg %p65
        $region50: #{tpu_custom_call.1} parent=47 // pred_check_branch
          %271 = sbr.rel (%p269) target = $region52
        $region51: #{tpu_custom_call.1} parent=47 // pred_region
          %272 = dma.done [#allocation3], 512
        $region52: #{tpu_custom_call.1} parent=47 // pred_fallthru
          _
        // Predicated region
        $region53: #{tpu_custom_call.1} parent=47 // pred_check
          %p273 = pneg %p149
        $region54: #{tpu_custom_call.1} parent=47 // pred_check_branch
          %275 = sbr.rel (%p273) target = $region56
        $region55: #{tpu_custom_call.1} parent=47 // pred_region
          %276 = dma.done [#allocation6], 2048
        $region56: #{tpu_custom_call.1} parent=47 // pred_fallthru
          _
        %s277 = smul.u32 4, %s23
        %p278 = scmp.lt.s32.totalorder %s277, 11
        %s279 = scalar_select %p278, %s277, 11
        %s280 = smul.addr %s279, 8
        %s281 = scalar_lea.vmem %s0, %s280
        %p282 = pneg %p44
        %p283 = pneg %p41
        %p284 = pneg %p65
        %p285 = pneg %p62
        %p286 = pneg %p86
        %p287 = pneg %p83
        %p288 = pneg %p107
        %p289 = pneg %p104
        %p290 = pneg %p128
        %p291 = pneg %p125
        %p292 = pneg %p149
        %p293 = pneg %p146
        %p294 = pneg %p170
        %p295 = pneg %p167
        %p296 = pneg %p196
        %p297 = pneg %p193
        %s298 = sand.u32 %s183, 1
        %s299 = scalar_lea.sflag [#allocation4], %s298
        %s300 = sand.u32 %s183, 1
        %s301 = smul.addr %s300, 32
        %s302 = scalar_lea.vmem [#allocation7], %s301
        %s303 = smul.u32 4, %s23
        %p304 = scmp.lt.s32.totalorder %s303, 11
        %s305 = scalar_select %p304, %s303, 11
        %s306 = smul.addr %s305, 8
        %s307 = scalar_lea.vmem %s0, %s306
        %s308 = smul.u32 4, %s23
        %s309 = smul.u32 4, %s23
        %v310 = vld [vmem:[%s307] sm:$0xff]
        %v311 = vld [vmem:[%s307 + $0x8] sm:$0xff]
        %v312 = vld [vmem:[%s307 + $0x10] sm:$0xff]
        %v313 = vld [vmem:[%s307 + $0x18] sm:$0xff]
        %v314 = vld [vmem:[#allocation2] sm:$0xff]
        %v315 = vld [vmem:[#allocation2 + $0x8] sm:$0xff]
        %v316 = vld [vmem:[#allocation2 + $0x10] sm:$0xff]
        %v317 = vld [vmem:[#allocation2 + $0x18] sm:$0xff]
        %v318 = vld [vmem:[%s2] sm:$0x1]
        %v320 = vlaneseq
        %v321 = vshrl.u32 %v320, 7
        %v322 = vsub.s32 0, %v321
        %v323 = vrot.slane %v318, %v322
        %vm325 = vcmask 261120
        %v327 = vsel %vm325, %v310, 0
        %v330 = vsel %vm325, %v311, 0
        %v333 = vsel %vm325, %v312, 0
        %v336 = vsel %vm325, %v313, 0
        %338 = vmatprep.subr.mxu0 0.0
        %339 = vmatpush1.msra.mxu0 0.0
        %340 = vmatprep.subr.mxu0 0.0
        %341 = vmatpush1.msra.mxu0 0.0
        %342 = vmatprep.subr.mxu0 0.0
        %343 = vmatpush1.msra.mxu0 0.0
        %344 = vmatprep.subr.mxu0 0.0
        %345 = vmatpush1.msra.mxu0 0.0
        %346 = vmatprep.subr.mxu0 0.0
        %347 = vmatpush1.msra.mxu0 0.0
        %348 = vmatprep.subr.mxu0 0.0
        %349 = vmatpush1.msra.mxu0 0.0
        %350 = vmatprep.subr.mxu0 0.0
        %351 = vmatpush1.msra.mxu0 0.0
        %352 = vmatprep.subr.mxu0 0.0
        %353 = vmatpush1.msra.mxu0 0.0
        %354 = vmatprep.subr.mxu0 0.0
        %355 = vmatpush1.msra.mxu0 0.0
        %356 = vmatprep.subr.mxu0 0.0
        %357 = vmatpush1.msra.mxu0 0.0
        %358 = vmatprep.subr.mxu0 0.0
        %359 = vmatpush1.msra.mxu0 0.0
        %360 = vmatprep.subr.mxu0 0.0
        %361 = vmatpush1.msra.mxu0 0.0
        %362 = vmatprep.subr.mxu0 0.0
        %363 = vmatpush1.msra.mxu0 %v317
        %364 = vmatprep.subr.mxu0 0.0
        %365 = vmatpush1.msra.mxu0 %v316
        %366 = vmatprep.subr.mxu0 0.0
        %367 = vmatpush1.msra.mxu0 %v315
        %368 = vmatprep.subr.mxu0 0.0
        %369 = vmatpush1.msra.mxu0 %v314
        %370 = vmatprep.subr.mxu0 0.0
        %371 = vmatpush2.msra.mxu0 0.0
        %372 = vmatprep.subr.mxu0 0.0
        %373 = vmatpush2.msra.mxu0 0.0
        %374 = vmatprep.subr.mxu0 0.0
        %375 = vmatpush2.msra.mxu0 0.0
        %376 = vmatprep.subr.mxu0 0.0
        %377 = vmatpush2.msra.mxu0 0.0
        %378 = vmatprep.subr.mxu0 0.0
        %379 = vmatpush2.msra.mxu0 0.0
        %380 = vmatprep.subr.mxu0 0.0
        %381 = vmatpush2.msra.mxu0 0.0
        %382 = vmatprep.subr.mxu0 0.0
        %383 = vmatpush2.msra.mxu0 0.0
        %384 = vmatprep.subr.mxu0 0.0
        %385 = vmatpush2.msra.mxu0 0.0
        %386 = vmatprep.subr.mxu0 0.0
        %387 = vmatpush2.msra.mxu0 0.0
        %388 = vmatprep.subr.mxu0 0.0
        %389 = vmatpush2.msra.mxu0 0.0
        %390 = vmatprep.subr.mxu0 0.0
        %391 = vmatpush2.msra.mxu0 0.0
        %392 = vmatprep.subr.mxu0 0.0
        %393 = vmatpush2.msra.mxu0 0.0
        %394 = vmatprep.subr.mxu0 0.0
        %395 = vmatpush2.msra.mxu0 0.0
        %396 = vmatprep.subr.mxu0 0.0
        %397 = vmatpush2.msra.mxu0 0.0
        %398 = vmatprep.subr.mxu0 0.0
        %399 = vmatpush2.msra.mxu0 0.0
        %400 = vmatprep.subr.mxu0 0.0
        %401 = vmatpush2.msra.mxu0 0.0
        %402 = vmatprep.mubr.f32.mxu0 0.0
        %403 = vmatmul.mubr.f32.gmra.mxu0 %v327
        %v404 = vpop.f32.mrf.mxu0
        %v405 = vadd.f32 %v323, %v404
        %v406 = vpop.f32.mrf.mxu0
        %407 = vmatprep.mubr.f32.mxu0 0.0
        %408 = vmatmul.mubr.f32.gmra.mxu0 %v330
        %v409 = vpop.f32.mrf.mxu0
        %v410 = vadd.f32 %v323, %v409
        %v411 = vpop.f32.mrf.mxu0
        %412 = vmatprep.mubr.f32.mxu0 0.0
        %413 = vmatmul.mubr.f32.gmra.mxu0 %v333
        %v414 = vpop.f32.mrf.mxu0
        %v415 = vadd.f32 %v323, %v414
        %v416 = vpop.f32.mrf.mxu0
        %417 = vmatprep.mubr.f32.mxu0 0.0
        %418 = vmatmul.mubr.f32.gmra.mxu0 %v336
        %v419 = vpop.f32.mrf.mxu0
        %v420 = vadd.f32 %v323, %v419
        %v421 = vpop.f32.mrf.mxu0
        %422 = vdwg.mxu0
        %v423 = vmax.f32 %v405, 0.0
        %v424 = vmax.f32 %v410, 0.0
        %v425 = vmax.f32 %v415, 0.0
        %v426 = vmax.f32 %v420, 0.0
        %v427 = vld [vmem:[%s3] sm:$0xff]
        %v428 = vld [vmem:[%s3 + $0x8] sm:$0xff]
        %v429 = vld [vmem:[%s3 + $0x10] sm:$0xff]
        %v430 = vld [vmem:[%s3 + $0x18] sm:$0xff]
        %v431 = vld [vmem:[%s3 + $0x20] sm:$0xff]
        %v432 = vld [vmem:[%s3 + $0x28] sm:$0xff]
        %v433 = vld [vmem:[%s3 + $0x30] sm:$0xff]
        %v434 = vld [vmem:[%s3 + $0x38] sm:$0xff]
        %v435 = vld [vmem:[%s3 + $0x40] sm:$0xff]
        %v436 = vld [vmem:[%s3 + $0x48] sm:$0xff]
        %v437 = vld [vmem:[%s3 + $0x50] sm:$0xff]
        %v438 = vld [vmem:[%s3 + $0x58] sm:$0xff]
        %v439 = vld [vmem:[%s3 + $0x60] sm:$0xff]
        %v440 = vld [vmem:[%s3 + $0x68] sm:$0xff]
        %v441 = vld [vmem:[%s3 + $0x70] sm:$0xff]
        %v442 = vld [vmem:[%s3 + $0x78] sm:$0xff]
        %v443 = vld [vmem:[%s4] sm:$0x1]
        %v445 = vlaneseq
        %v446 = vshrl.u32 %v445, 7
        %v447 = vsub.s32 0, %v446
        %v448 = vrot.slane %v443, %v447
        %450 = vmatprep.subr.mxu0 0.0
        %451 = vmatpush1.msra.mxu0 %v442
        %452 = vmatprep.subr.mxu0 0.0
        %453 = vmatpush1.msra.mxu0 %v441
        %454 = vmatprep.subr.mxu0 0.0
        %455 = vmatpush1.msra.mxu0 %v440
        %456 = vmatprep.subr.mxu0 0.0
        %457 = vmatpush1.msra.mxu0 %v439
        %458 = vmatprep.subr.mxu0 0.0
        %459 = vmatpush1.msra.mxu0 %v438
        %460 = vmatprep.subr.mxu0 0.0
        %461 = vmatpush1.msra.mxu0 %v437
        %462 = vmatprep.subr.mxu0 0.0
        %463 = vmatpush1.msra.mxu0 %v436
        %464 = vmatprep.subr.mxu0 0.0
        %465 = vmatpush1.msra.mxu0 %v435
        %466 = vmatprep.subr.mxu0 0.0
        %467 = vmatpush1.msra.mxu0 %v434
        %468 = vmatprep.subr.mxu0 0.0
        %469 = vmatpush1.msra.mxu0 %v433
        %470 = vmatprep.subr.mxu0 0.0
        %471 = vmatpush1.msra.mxu0 %v432
        %472 = vmatprep.subr.mxu0 0.0
        %473 = vmatpush1.msra.mxu0 %v431
        %474 = vmatprep.subr.mxu0 0.0
        %475 = vmatpush1.msra.mxu0 %v430
        %476 = vmatprep.subr.mxu0 0.0
        %477 = vmatpush1.msra.mxu0 %v429
        %478 = vmatprep.subr.mxu0 0.0
        %479 = vmatpush1.msra.mxu0 %v428
        %480 = vmatprep.subr.mxu0 0.0
        %481 = vmatpush1.msra.mxu0 %v427
        %482 = vmatprep.subr.mxu0 0.0
        %483 = vmatpush2.msra.mxu0 0.0
        %484 = vmatprep.subr.mxu0 0.0
        %485 = vmatpush2.msra.mxu0 0.0
        %486 = vmatprep.subr.mxu0 0.0
        %487 = vmatpush2.msra.mxu0 0.0
        %488 = vmatprep.subr.mxu0 0.0
        %489 = vmatpush2.msra.mxu0 0.0
        %490 = vmatprep.subr.mxu0 0.0
        %491 = vmatpush2.msra.mxu0 0.0
        %492 = vmatprep.subr.mxu0 0.0
        %493 = vmatpush2.msra.mxu0 0.0
        %494 = vmatprep.subr.mxu0 0.0
        %495 = vmatpush2.msra.mxu0 0.0
        %496 = vmatprep.subr.mxu0 0.0
        %497 = vmatpush2.msra.mxu0 0.0
        %498 = vmatprep.subr.mxu0 0.0
        %499 = vmatpush2.msra.mxu0 0.0
        %500 = vmatprep.subr.mxu0 0.0
        %501 = vmatpush2.msra.mxu0 0.0
        %502 = vmatprep.subr.mxu0 0.0
        %503 = vmatpush2.msra.mxu0 0.0
        %504 = vmatprep.subr.mxu0 0.0
        %505 = vmatpush2.msra.mxu0 0.0
        %506 = vmatprep.subr.mxu0 0.0
        %507 = vmatpush2.msra.mxu0 0.0
        %508 = vmatprep.subr.mxu0 0.0
        %509 = vmatpush2.msra.mxu0 0.0
        %510 = vmatprep.subr.mxu0 0.0
        %511 = vmatpush2.msra.mxu0 0.0
        %512 = vmatprep.subr.mxu0 0.0
        %513 = vmatpush2.msra.mxu0 0.0
        %514 = vmatprep.mubr.f32.mxu0 0.0
        %515 = vmatmul.mubr.f32.gmra.mxu0 %v423
        %v516 = vpop.f32.mrf.mxu0
        %v517 = vadd.f32 %v448, %v516
        %v518 = vpop.f32.mrf.mxu0
        %519 = vmatprep.mubr.f32.mxu0 0.0
        %520 = vmatmul.mubr.f32.gmra.mxu0 %v424
        %v521 = vpop.f32.mrf.mxu0
        %v522 = vadd.f32 %v448, %v521
        %v523 = vpop.f32.mrf.mxu0
        %524 = vmatprep.mubr.f32.mxu0 0.0
        %525 = vmatmul.mubr.f32.gmra.mxu0 %v425
        %v526 = vpop.f32.mrf.mxu0
        %v527 = vadd.f32 %v448, %v526
        %v528 = vpop.f32.mrf.mxu0
        %529 = vmatprep.mubr.f32.mxu0 0.0
        %530 = vmatmul.mubr.f32.gmra.mxu0 %v426
        %v531 = vpop.f32.mrf.mxu0
        %v532 = vadd.f32 %v448, %v531
        %v533 = vpop.f32.mrf.mxu0
        %534 = vdwg.mxu0
        %v535 = vmax.f32 %v517, 0.0
        %v536 = vmax.f32 %v522, 0.0
        %v537 = vmax.f32 %v527, 0.0
        %v538 = vmax.f32 %v532, 0.0
        %v539 = vld [vmem:[#allocation5] sm:$0xff]
        %v540 = vld [vmem:[#allocation5 + $0x8] sm:$0xff]
        %v541 = vld [vmem:[#allocation5 + $0x10] sm:$0xff]
        %v542 = vld [vmem:[#allocation5 + $0x18] sm:$0xff]
        %v543 = vld [vmem:[#allocation5 + $0x20] sm:$0xff]
        %v544 = vld [vmem:[#allocation5 + $0x28] sm:$0xff]
        %v545 = vld [vmem:[#allocation5 + $0x30] sm:$0xff]
        %v546 = vld [vmem:[#allocation5 + $0x38] sm:$0xff]
        %v547 = vld [vmem:[#allocation5 + $0x40] sm:$0xff]
        %v548 = vld [vmem:[#allocation5 + $0x48] sm:$0xff]
        %v549 = vld [vmem:[#allocation5 + $0x50] sm:$0xff]
        %v550 = vld [vmem:[#allocation5 + $0x58] sm:$0xff]
        %v551 = vld [vmem:[#allocation5 + $0x60] sm:$0xff]
        %v552 = vld [vmem:[#allocation5 + $0x68] sm:$0xff]
        %v553 = vld [vmem:[#allocation5 + $0x70] sm:$0xff]
        %v554 = vld [vmem:[#allocation5 + $0x78] sm:$0xff]
        %v555 = vld [vmem:[%s6] sm:$0x1]
        %v557 = vlaneseq
        %v558 = vshrl.u32 %v557, 7
        %v559 = vsub.s32 0, %v558
        %v560 = vrot.slane %v555, %v559
        %562 = vmatprep.subr.mxu0 0.0
        %563 = vmatpush1.msra.mxu0 %v554
        %564 = vmatprep.subr.mxu0 0.0
        %565 = vmatpush1.msra.mxu0 %v553
        %566 = vmatprep.subr.mxu0 0.0
        %567 = vmatpush1.msra.mxu0 %v552
        %568 = vmatprep.subr.mxu0 0.0
        %569 = vmatpush1.msra.mxu0 %v551
        %570 = vmatprep.subr.mxu0 0.0
        %571 = vmatpush1.msra.mxu0 %v550
        %572 = vmatprep.subr.mxu0 0.0
        %573 = vmatpush1.msra.mxu0 %v549
        %574 = vmatprep.subr.mxu0 0.0
        %575 = vmatpush1.msra.mxu0 %v548
        %576 = vmatprep.subr.mxu0 0.0
        %577 = vmatpush1.msra.mxu0 %v547
        %578 = vmatprep.subr.mxu0 0.0
        %579 = vmatpush1.msra.mxu0 %v546
        %580 = vmatprep.subr.mxu0 0.0
        %581 = vmatpush1.msra.mxu0 %v545
        %582 = vmatprep.subr.mxu0 0.0
        %583 = vmatpush1.msra.mxu0 %v544
        %584 = vmatprep.subr.mxu0 0.0
        %585 = vmatpush1.msra.mxu0 %v543
        %586 = vmatprep.subr.mxu0 0.0
        %587 = vmatpush1.msra.mxu0 %v542
        %588 = vmatprep.subr.mxu0 0.0
        %589 = vmatpush1.msra.mxu0 %v541
        %590 = vmatprep.subr.mxu0 0.0
        %591 = vmatpush1.msra.mxu0 %v540
        %592 = vmatprep.subr.mxu0 0.0
        %593 = vmatpush1.msra.mxu0 %v539
        %594 = vmatprep.subr.mxu0 0.0
        %595 = vmatpush2.msra.mxu0 0.0
        %596 = vmatprep.subr.mxu0 0.0
        %597 = vmatpush2.msra.mxu0 0.0
        %598 = vmatprep.subr.mxu0 0.0
        %599 = vmatpush2.msra.mxu0 0.0
        %600 = vmatprep.subr.mxu0 0.0
        %601 = vmatpush2.msra.mxu0 0.0
        %602 = vmatprep.subr.mxu0 0.0
        %603 = vmatpush2.msra.mxu0 0.0
        %604 = vmatprep.subr.mxu0 0.0
        %605 = vmatpush2.msra.mxu0 0.0
        %606 = vmatprep.subr.mxu0 0.0
        %607 = vmatpush2.msra.mxu0 0.0
        %608 = vmatprep.subr.mxu0 0.0
        %609 = vmatpush2.msra.mxu0 0.0
        %610 = vmatprep.subr.mxu0 0.0
        %611 = vmatpush2.msra.mxu0 0.0
        %612 = vmatprep.subr.mxu0 0.0
        %613 = vmatpush2.msra.mxu0 0.0
        %614 = vmatprep.subr.mxu0 0.0
        %615 = vmatpush2.msra.mxu0 0.0
        %616 = vmatprep.subr.mxu0 0.0
        %617 = vmatpush2.msra.mxu0 0.0
        %618 = vmatprep.subr.mxu0 0.0
        %619 = vmatpush2.msra.mxu0 0.0
        %620 = vmatprep.subr.mxu0 0.0
        %621 = vmatpush2.msra.mxu0 0.0
        %622 = vmatprep.subr.mxu0 0.0
        %623 = vmatpush2.msra.mxu0 0.0
        %624 = vmatprep.subr.mxu0 0.0
        %625 = vmatpush2.msra.mxu0 0.0
        %626 = vmatprep.mubr.f32.mxu0 0.0
        %627 = vmatmul.mubr.f32.gmra.mxu0 %v535
        %v628 = vpop.f32.mrf.mxu0
        %v629 = vadd.f32 %v560, %v628
        %v630 = vpop.f32.mrf.mxu0
        %631 = vmatprep.mubr.f32.mxu0 0.0
        %632 = vmatmul.mubr.f32.gmra.mxu0 %v536
        %v633 = vpop.f32.mrf.mxu0
        %v634 = vadd.f32 %v560, %v633
        %v635 = vpop.f32.mrf.mxu0
        %636 = vmatprep.mubr.f32.mxu0 0.0
        %637 = vmatmul.mubr.f32.gmra.mxu0 %v537
        %v638 = vpop.f32.mrf.mxu0
        %v639 = vadd.f32 %v560, %v638
        %v640 = vpop.f32.mrf.mxu0
        %641 = vmatprep.mubr.f32.mxu0 0.0
        %642 = vmatmul.mubr.f32.gmra.mxu0 %v538
        %v643 = vpop.f32.mrf.mxu0
        %v644 = vadd.f32 %v560, %v643
        %v645 = vpop.f32.mrf.mxu0
        %646 = vdwg.mxu0
        %v647 = vlaneseq
        %v648 = vand.u32 %v647, 127
        %v649 = vtanh.pop %v629
        %v650 = vtanh.pop %v634
        %v651 = vtanh.pop %v639
        %v652 = vtanh.pop %v644
        %v653 = vmax.f32 %v629, 0.0
        %v654 = vmax.f32 %v634, 0.0
        %v655 = vmax.f32 %v639, 0.0
        %v656 = vmax.f32 %v644, 0.0
        %v657 = vand.u32 2147483647, %v629
        %v658 = vand.u32 2147483647, %v634
        %v659 = vand.u32 2147483647, %v639
        %v660 = vand.u32 2147483647, %v644
        %v661 = vsub.f32 0.0, %v657
        %v662 = vsub.f32 0.0, %v658
        %v663 = vsub.f32 0.0, %v659
        %v664 = vsub.f32 0.0, %v660
        %v665 = vmul.f32 %v661, 1.442695
        %v666 = vpow.pop %v665
        %v667 = vmul.f32 %v662, 1.442695
        %v668 = vpow.pop %v667
        %v669 = vmul.f32 %v663, 1.442695
        %v670 = vpow.pop %v669
        %v671 = vmul.f32 %v664, 1.442695
        %v672 = vpow.pop %v671
        %v673 = vadd.f32 %v666, 1.0
        %v674 = vadd.f32 %v668, 1.0
        %v675 = vadd.f32 %v670, 1.0
        %v676 = vadd.f32 %v672, 1.0
        %v677 = vlog2.pop %v673
        %v678 = vmul.f32 %v677, 0.6931472
        %v679 = vlog2.pop %v674
        %v680 = vmul.f32 %v679, 0.6931472
        %v681 = vlog2.pop %v675
        %v682 = vmul.f32 %v681, 0.6931472
        %v683 = vlog2.pop %v676
        %v684 = vmul.f32 %v683, 0.6931472
        %v685 = vadd.f32 %v653, %v678
        %v686 = vadd.f32 %v654, %v680
        %v687 = vadd.f32 %v655, %v682
        %v688 = vadd.f32 %v656, %v684
        %v689 = vadd.f32 %v685, 0.0001
        %v690 = vadd.f32 %v686, 0.0001
        %v691 = vadd.f32 %v687, 0.0001
        %v692 = vadd.f32 %v688, 0.0001
        %vm693 = vcmp.lt.s32.totalorder %v648, 35
        %vm694 = vcmp.lt.s32.totalorder %v648, 70
        %v695 = vsel %vm694, %v689, %v629
        %v696 = vsel %vm694, %v690, %v634
        %v697 = vsel %vm694, %v691, %v639
        %v698 = vsel %vm694, %v692, %v644
        %v699 = vsel %vm693, %v649, %v695
        %v700 = vsel %vm693, %v650, %v696
        %v701 = vsel %vm693, %v651, %v697
        %v702 = vsel %vm693, %v652, %v698
        %703 = vst [vmem:[%s302] sm:$0xff] %v699
        %704 = vst [vmem:[%s302 + $0x8] sm:$0xff] %v700
        %705 = vst [vmem:[%s302 + $0x10] sm:$0xff] %v701
        %706 = vst [vmem:[%s302 + $0x18] sm:$0xff] %v702
        %s707 = sand.u32 %s183, 1
        %s708 = scalar_lea.sflag [#allocation4], %s707
        %s709 = sand.u32 %s183, 1
        %s710 = smul.addr %s709, 32
        %s711 = scalar_lea.vmem [#allocation7], %s710
        // Predicated region
        $region57: #{tpu_custom_call.1} parent=47 // pred_check
          %p712 = pneg %p193
        $region58: #{tpu_custom_call.1} parent=47 // pred_check_branch
          %714 = sbr.rel (%p712) target = $region60
        $region59: #{tpu_custom_call.1} parent=47 // pred_region
          %s715 = smul.u32 4, %s23
          %s717 = ssub.s32 512, 512
          %718 = vsyncadd %s708, %s717
          %s719 = smul.addr %s715, 128
          %s720 = scalar_lea.hbm %s7, %s719
          %s721 = sshll.u32 %s711, 4
          %s722 = int_to_ptr.vmem [resolvable:$true] %s721
          %727 = dma.vmem_to_hbm [thread:$0]  %s722, 512, %s720, %s708, 128, 128, 8
        $region60: #{tpu_custom_call.1} parent=47 // pred_fallthru
          _
      $region48: #{tpu_custom_call.1} parent=5 // pred_fallthru
        _
      %p728 = scmp.le.s32.totalorder 2, %s18
      // Predicated region
      $region61: #{tpu_custom_call.1} parent=5 // pred_check
        %p729 = pneg %p728
      $region62: #{tpu_custom_call.1} parent=5 // pred_check_branch
        %731 = sbr.rel (%p729) target = $region64
      $region63: #{tpu_custom_call.1} parent=5 // pred_region
        %s732 = ssub.s32 %s18, 2
        // Predicated region
        $region65: #{tpu_custom_call.1} parent=63 // pred_check
          %p733 = pneg %p199
        $region66: #{tpu_custom_call.1} parent=63 // pred_check_branch
          %735 = sbr.rel (%p733) target = $region68
        $region67: #{tpu_custom_call.1} parent=63 // pred_region
          %s736 = sand.u32 %s184, 1
          %s737 = scalar_lea.sflag [#allocation4], %s736
          %s738 = sand.u32 %s184, 1
          %s739 = smul.addr %s738, 32
          %s740 = scalar_lea.vmem [#allocation7], %s739
          %741 = dma.done %s737, 512
        $region68: #{tpu_custom_call.1} parent=63 // pred_fallthru
          _
      $region64: #{tpu_custom_call.1} parent=5 // pred_fallthru
        _
    $region6: #{tpu_custom_call.1} parent=1 // loop_footer
      %s22 = sadd.s32 1, %s18
    $region7: #{tpu_custom_call.1} parent=1 // loop_footer_branch
      %17 = sbr.rel target = $region3
    $region8: #{tpu_custom_call.1} parent=1 // loop_exit
      _
    %742 = vsyncpa [#allocation3], 1
    %s743 = scalar_lea.sflag [#allocation3], 1
    %744 = vsyncpa %s743, 1
    %745 = vsyncpa [#allocation6], 1
    %746 = vsyncpa [#allocation4], 1
    %s747 = scalar_lea.sflag [#allocation4], 1
    %748 = vsyncpa %s747, 1

// kernel: tpu_custom_call.1
$region0: #{tpu_custom_call.1}
  #allocation0 [shape = 'u32[]', space=smem, size = 0x4, offset = 0x4, fixed_abs, tag = 'smem constant byte address 0x4 - core index']
  #allocation1 [shape = 'u32[144,128]{1,0:T(1,128)}', space=vmem, size = 0x12000, scoped, tag = 'internal scratch']
  %s0 = inlined_call_operand.vmem [shape: f32[96,32], index: 0, kind: input, shape index: {}]
  %s1 = inlined_call_operand.hbm [shape: f32[32,128], index: 1, kind: input, shape index: {}]
  %s2 = inlined_call_operand.vmem [shape: f32[1,128], index: 2, kind: input, shape index: {}]
  %s3 = inlined_call_operand.vmem [shape: f32[128,128], index: 3, kind: input, shape index: {}]
  %s4 = inlined_call_operand.vmem [shape: f32[1,128], index: 4, kind: input, shape index: {}]
  %s5 = inlined_call_operand.hbm [shape: f32[128,128], index: 5, kind: input, shape index: {}]
  %s6 = inlined_call_operand.vmem [shape: f32[1,128], index: 6, kind: input, shape index: {}]
  %s7 = inlined_call_operand.hbm [shape: f32[96,128], index: 7, kind: output, shape index: {}]
  %s8 = sld [smem:[#allocation0]]
  $region69: #{tpu_custom_call.1} parent=0
    _
  %s10 = ssub.s32 1, %s8
  %s11 = scalar_select 0, %s10, %s8
  $region1: #{tpu_custom_call.1} parent=0
    #allocation2 [shape = 'u8[16384]{0}', space=vmem, size = 0x4000, scoped, tag = 'input window, operand 1, single buffered']
    #allocation3 [shape = 's32[2]{0}', space=sflag, size = 0x8, scoped, tag = 'scoped memory for tpu_custom_call.1']
    #allocation4 [shape = 's32[2]{0}', space=sflag, size = 0x8, scoped, tag = 'scoped memory for tpu_custom_call.1']
    #allocation5 [shape = 'u8[65536]{0}', space=vmem, size = 0x10000, scoped, tag = 'input window, operand 5, single buffered']
    #allocation6 [shape = 's32[1]{0}', space=sflag, size = 0x4, scoped, tag = 'scoped memory for tpu_custom_call.1']
    #allocation7 [shape = 'u8[32768]{0}', space=vmem, size = 0x8000, scoped, tag = 'output window, operand 0']
    %12 = vsyncpa [#allocation3], 0
    %13 = vsyncpa [#allocation6], 0
    %14 = vsyncpa [#allocation4], 0
    %s15 = scalar_lea.sflag [#allocation4], 1
    %16 = vsyncpa %s15, 0
    loop: start=0, step=1, limit=5
    $region2: #{tpu_custom_call.1} parent=1 // loop_pre_header
      _
    $region3: #{tpu_custom_call.1} parent=1 // loop_header
      %s18 = sphi 0, %s22
      %p19 = scmp.ge.s32.totalorder %s18, 5
      %s28 = sphi 0, %s30
      %s31 = sphi 0, %s28
      %s32 = sphi 0, %s31
      %s48 = sphi 0, %s32
      %s52 = sphi 0, %s52
      %s54 = sphi 0, %s52
      %s55 = sphi 0, %s54
      %s69 = sphi 0, %s55
      %s73 = sphi 0, %s73
      %s75 = sphi 0, %s73
      %s76 = sphi 0, %s75
      %s90 = sphi 0, %s76
      %s94 = sphi 0, %s94
      %s96 = sphi 0, %s94
      %s97 = sphi 0, %s96
      %s111 = sphi 0, %s97
      %s115 = sphi 0, %s115
      %s117 = sphi 0, %s115
      %s118 = sphi 0, %s117
      %s132 = sphi 0, %s118
      %s136 = sphi 0, %s136
      %s138 = sphi 0, %s136
      %s139 = sphi 0, %s138
      %s153 = sphi 0, %s139
      %s157 = sphi 0, %s157
      %s159 = sphi 0, %s157
      %s160 = sphi 0, %s159
      %s174 = sphi 0, %s160
      %s180 = sphi 0, %s182
      %s183 = sphi 0, %s180
      %s184 = sphi 0, %s183
      %s200 = sphi 0, %s184
    $region4: #{tpu_custom_call.1} parent=1 // loop_header_branch
      %21 = sbr.rel (%p19) target = $region8
    $region5: #{tpu_custom_call.1} parent=1 // loop_body
      %s23 = ssub.s32 %s18, 1
      %s24 = ssub.s32 %s18, 2
      %s25 = sadd.s32 %s18, 1
      %s26 = ssub.s32 %s18, %s25
      %p27 = scmp.eq.s32.totalorder %s26, 0
      %s29 = sadd.s32 %s28, 1
      %s30 = scalar_select %p27, %s28, %s29
      %p33 = pneg %p27
      %p34 = scmp.eq.s32.totalorder %s18, 2
      %p35 = por %p33, %p34
      %p36 = scmp.ne.s32.totalorder %s28, %s31
      %p37 = scmp.eq.s32.totalorder %s18, 0
      %p38 = por %p36, %p37
      %p39 = scmp.ne.s32.totalorder %s28, %s31
      %p40 = scmp.eq.s32.totalorder %s23, 2
      %p41 = por %p39, %p40
      %p42 = scmp.ne.s32.totalorder %s31, %s32
      %p43 = scmp.eq.s32.totalorder %s23, 0
      %p44 = por %p42, %p43
      %p45 = scmp.ne.s32.totalorder %s31, %s32
      %p46 = scmp.eq.s32.totalorder %s24, 2
      %p47 = por %p45, %p46
      %p49 = scmp.ne.s32.totalorder %s32, %s48
      %p50 = scmp.eq.s32.totalorder %s24, 0
      %p51 = por %p49, %p50
      %s53 = sadd.s32 %s52, 1
      %p56 = scmp.eq.s32.totalorder %s18, 2
      %p57 = scmp.ne.s32.totalorder %s52, %s54
      %p58 = scmp.eq.s32.totalorder %s18, 0
      %p59 = por %p57, %p58
      %p60 = scmp.ne.s32.totalorder %s52, %s54
      %p61 = scmp.eq.s32.totalorder %s23, 2
      %p62 = por %p60, %p61
      %p63 = scmp.ne.s32.totalorder %s54, %s55
      %p64 = scmp.eq.s32.totalorder %s23, 0
      %p65 = por %p63, %p64
      %p66 = scmp.ne.s32.totalorder %s54, %s55
      %p67 = scmp.eq.s32.totalorder %s24, 2
      %p68 = por %p66, %p67
      %p70 = scmp.ne.s32.totalorder %s55, %s69
      %p71 = scmp.eq.s32.totalorder %s24, 0
      %p72 = por %p70, %p71
      %s74 = sadd.s32 %s73, 1
      %p77 = scmp.eq.s32.totalorder %s18, 2
      %p78 = scmp.ne.s32.totalorder %s73, %s75
      %p79 = scmp.eq.s32.totalorder %s18, 0
      %p80 = por %p78, %p79
      %p81 = scmp.ne.s32.totalorder %s73, %s75
      %p82 = scmp.eq.s32.totalorder %s23, 2
      %p83 = por %p81, %p82
      %p84 = scmp.ne.s32.totalorder %s75, %s76
      %p85 = scmp.eq.s32.totalorder %s23, 0
      %p86 = por %p84, %p85
      %p87 = scmp.ne.s32.totalorder %s75, %s76
      %p88 = scmp.eq.s32.totalorder %s24, 2
      %p89 = por %p87, %p88
      %p91 = scmp.ne.s32.totalorder %s76, %s90
      %p92 = scmp.eq.s32.totalorder %s24, 0
      %p93 = por %p91, %p92
      %s95 = sadd.s32 %s94, 1
      %p98 = scmp.eq.s32.totalorder %s18, 2
      %p99 = scmp.ne.s32.totalorder %s94, %s96
      %p100 = scmp.eq.s32.totalorder %s18, 0
      %p101 = por %p99, %p100
      %p102 = scmp.ne.s32.totalorder %s94, %s96
      %p103 = scmp.eq.s32.totalorder %s23, 2
      %p104 = por %p102, %p103
      %p105 = scmp.ne.s32.totalorder %s96, %s97
      %p106 = scmp.eq.s32.totalorder %s23, 0
      %p107 = por %p105, %p106
      %p108 = scmp.ne.s32.totalorder %s96, %s97
      %p109 = scmp.eq.s32.totalorder %s24, 2
      %p110 = por %p108, %p109
      %p112 = scmp.ne.s32.totalorder %s97, %s111
      %p113 = scmp.eq.s32.totalorder %s24, 0
      %p114 = por %p112, %p113
      %s116 = sadd.s32 %s115, 1
      %p119 = scmp.eq.s32.totalorder %s18, 2
      %p120 = scmp.ne.s32.totalorder %s115, %s117
      %p121 = scmp.eq.s32.totalorder %s18, 0
      %p122 = por %p120, %p121
      %p123 = scmp.ne.s32.totalorder %s115, %s117
      %p124 = scmp.eq.s32.totalorder %s23, 2
      %p125 = por %p123, %p124
      %p126 = scmp.ne.s32.totalorder %s117, %s118
      %p127 = scmp.eq.s32.totalorder %s23, 0
      %p128 = por %p126, %p127
      %p129 = scmp.ne.s32.totalorder %s117, %s118
      %p130 = scmp.eq.s32.totalorder %s24, 2
      %p131 = por %p129, %p130
      %p133 = scmp.ne.s32.totalorder %s118, %s132
      %p134 = scmp.eq.s32.totalorder %s24, 0
      %p135 = por %p133, %p134
      %s137 = sadd.s32 %s136, 1
      %p140 = scmp.eq.s32.totalorder %s18, 2
      %p141 = scmp.ne.s32.totalorder %s136, %s138
      %p142 = scmp.eq.s32.totalorder %s18, 0
      %p143 = por %p141, %p142
      %p144 = scmp.ne.s32.totalorder %s136, %s138
      %p145 = scmp.eq.s32.totalorder %s23, 2
      %p146 = por %p144, %p145
      %p147 = scmp.ne.s32.totalorder %s138, %s139
      %p148 = scmp.eq.s32.totalorder %s23, 0
      %p149 = por %p147, %p148
      %p150 = scmp.ne.s32.totalorder %s138, %s139
      %p151 = scmp.eq.s32.totalorder %s24, 2
      %p152 = por %p150, %p151
      %p154 = scmp.ne.s32.totalorder %s139, %s153
      %p155 = scmp.eq.s32.totalorder %s24, 0
      %p156 = por %p154, %p155
      %s158 = sadd.s32 %s157, 1
      %p161 = scmp.eq.s32.totalorder %s18, 2
      %p162 = scmp.ne.s32.totalorder %s157, %s159
      %p163 = scmp.eq.s32.totalorder %s18, 0
      %p164 = por %p162, %p163
      %p165 = scmp.ne.s32.totalorder %s157, %s159
      %p166 = scmp.eq.s32.totalorder %s23, 2
      %p167 = por %p165, %p166
      %p168 = scmp.ne.s32.totalorder %s159, %s160
      %p169 = scmp.eq.s32.totalorder %s23, 0
      %p170 = por %p168, %p169
      %p171 = scmp.ne.s32.totalorder %s159, %s160
      %p172 = scmp.eq.s32.totalorder %s24, 2
      %p173 = por %p171, %p172
      %p175 = scmp.ne.s32.totalorder %s160, %s174
      %p176 = scmp.eq.s32.totalorder %s24, 0
      %p177 = por %p175, %p176
      %s178 = ssub.s32 %s18, %s25
      %p179 = scmp.eq.s32.totalorder %s178, 0
      %s181 = sadd.s32 %s180, 1
      %s182 = scalar_select %p179, %s180, %s181
      %p185 = pneg %p179
      %p186 = scmp.eq.s32.totalorder %s18, 2
      %p187 = por %p185, %p186
      %p188 = scmp.ne.s32.totalorder %s180, %s183
      %p189 = scmp.eq.s32.totalorder %s18, 0
      %p190 = por %p188, %p189
      %p191 = scmp.ne.s32.totalorder %s180, %s183
      %p192 = scmp.eq.s32.totalorder %s23, 2
      %p193 = por %p191, %p192
      %p194 = scmp.ne.s32.totalorder %s183, %s184
      %p195 = scmp.eq.s32.totalorder %s23, 0
      %p196 = por %p194, %p195
      %p197 = scmp.ne.s32.totalorder %s183, %s184
      %p198 = scmp.eq.s32.totalorder %s24, 2
      %p199 = por %p197, %p198
      %p201 = scmp.ne.s32.totalorder %s184, %s200
      %p202 = scmp.eq.s32.totalorder %s24, 0
      %p203 = por %p201, %p202
      %p204 = scmp.le.s32.totalorder 1, %s18
      %p205 = scmp.lt.s32.totalorder %s18, 4
      %p206 = pnand %p204, %p205
      %p207 = pneg %p206
      // Predicated region
      $region9: #{tpu_custom_call.1} parent=5 // pred_check
        _
      $region10: #{tpu_custom_call.1} parent=5 // pred_check_branch
        %209 = sbr.rel (%p206) target = $region12
      $region11: #{tpu_custom_call.1} parent=5 // pred_region
        %s210 = ssub.s32 %s18, 1
        // Predicated region
        $region13: #{tpu_custom_call.1} parent=11 // pred_check
          %p211 = pneg %p65
        $region14: #{tpu_custom_call.1} parent=11 // pred_check_branch
          %213 = sbr.rel (%p211) target = $region16
        $region15: #{tpu_custom_call.1} parent=11 // pred_region
          %s215 = ssub.s32 512, 512
          %216 = vsyncadd [#allocation3], %s215
          %s217 = sshll.u32 [#allocation2], 4
          %s218 = int_to_ptr.vmem [resolvable:$true] %s217
          %223 = dma.hbm_to_vmem [thread:$0]  %s1, 512, %s218, [#allocation3], 128, 128, 8
        $region16: #{tpu_custom_call.1} parent=11 // pred_fallthru
          _
        // Predicated region
        $region17: #{tpu_custom_call.1} parent=11 // pred_check
          %p224 = pneg %p86
        $region18: #{tpu_custom_call.1} parent=11 // pred_check_branch
          %226 = sbr.rel (%p224) target = $region20
        $region19: #{tpu_custom_call.1} parent=11 // pred_region
          _
        $region20: #{tpu_custom_call.1} parent=11 // pred_fallthru
          _
        // Predicated region
        $region21: #{tpu_custom_call.1} parent=11 // pred_check
          %p227 = pneg %p107
        $region22: #{tpu_custom_call.1} parent=11 // pred_check_branch
          %229 = sbr.rel (%p227) target = $region24
        $region23: #{tpu_custom_call.1} parent=11 // pred_region
          _
        $region24: #{tpu_custom_call.1} parent=11 // pred_fallthru
          _
        // Predicated region
        $region25: #{tpu_custom_call.1} parent=11 // pred_check
          %p230 = pneg %p128
        $region26: #{tpu_custom_call.1} parent=11 // pred_check_branch
          %232 = sbr.rel (%p230) target = $region28
        $region27: #{tpu_custom_call.1} parent=11 // pred_region
          _
        $region28: #{tpu_custom_call.1} parent=11 // pred_fallthru
          _
        // Predicated region
        $region29: #{tpu_custom_call.1} parent=11 // pred_check
          %p233 = pneg %p149
        $region30: #{tpu_custom_call.1} parent=11 // pred_check_branch
          %235 = sbr.rel (%p233) target = $region32
        $region31: #{tpu_custom_call.1} parent=11 // pred_region
          %s237 = ssub.s32 2048, 2048
          %238 = vsyncadd [#allocation6], %s237
          %s239 = sshll.u32 [#allocation5], 4
          %s240 = int_to_ptr.vmem [resolvable:$true] %s239
          %245 = dma.hbm_to_vmem [thread:$0]  %s5, 2048, %s240, [#allocation6], 128, 128, 8
        $region32: #{tpu_custom_call.1} parent=11 // pred_fallthru
          _
        // Predicated region
        $region33: #{tpu_custom_call.1} parent=11 // pred_check
          %p246 = pneg %p170
        $region34: #{tpu_custom_call.1} parent=11 // pred_check_branch
          %248 = sbr.rel (%p246) target = $region36
        $region35: #{tpu_custom_call.1} parent=11 // pred_region
          _
        $region36: #{tpu_custom_call.1} parent=11 // pred_fallthru
          _
      $region12: #{tpu_custom_call.1} parent=5 // pred_fallthru
        _
      %p249 = scmp.lt.s32.totalorder %s18, 3
      // Predicated region
      $region37: #{tpu_custom_call.1} parent=5 // pred_check
        %p250 = pneg %p249
      $region38: #{tpu_custom_call.1} parent=5 // pred_check_branch
        %252 = sbr.rel (%p250) target = $region40
      $region39: #{tpu_custom_call.1} parent=5 // pred_region
        // Predicated region
        $region41: #{tpu_custom_call.1} parent=39 // pred_check
          %p253 = pneg %p38
        $region42: #{tpu_custom_call.1} parent=39 // pred_check_branch
          %255 = sbr.rel (%p253) target = $region44
        $region43: #{tpu_custom_call.1} parent=39 // pred_region
          %s256 = smul.u32 4, %s18
          %p257 = scmp.lt.s32.totalorder %s256, 11
          %s258 = scalar_select %p257, %s256, 11
          %s259 = smul.addr %s258, 8
          %s260 = scalar_lea.vmem %s0, %s259
          %s261 = smul.u32 4, %s18
        $region44: #{tpu_custom_call.1} parent=39 // pred_fallthru
          _
      $region40: #{tpu_custom_call.1} parent=5 // pred_fallthru
        _
      %p262 = scmp.le.s32.totalorder 1, %s18
      %p263 = scmp.lt.s32.totalorder %s18, 4
      %p264 = pnand %p262, %p263
      %p265 = pneg %p264
      // Predicated region
      $region45: #{tpu_custom_call.1} parent=5 // pred_check
        _
      $region46: #{tpu_custom_call.1} parent=5 // pred_check_branch
        %267 = sbr.rel (%p264) target = $region48
      $region47: #{tpu_custom_call.1} parent=5 // pred_region
        %s268 = ssub.s32 %s18, 1
        // Predicated region
        $region49: #{tpu_custom_call.1} parent=47 // pred_check
          %p269 = pneg %p65
        $region50: #{tpu_custom_call.1} parent=47 // pred_check_branch
          %271 = sbr.rel (%p269) target = $region52
        $region51: #{tpu_custom_call.1} parent=47 // pred_region
          %272 = dma.done [#allocation3], 512
        $region52: #{tpu_custom_call.1} parent=47 // pred_fallthru
          _
        // Predicated region
        $region53: #{tpu_custom_call.1} parent=47 // pred_check
          %p273 = pneg %p149
        $region54: #{tpu_custom_call.1} parent=47 // pred_check_branch
          %275 = sbr.rel (%p273) target = $region56
        $region55: #{tpu_custom_call.1} parent=47 // pred_region
          %276 = dma.done [#allocation6], 2048
        $region56: #{tpu_custom_call.1} parent=47 // pred_fallthru
          _
        %s277 = smul.u32 4, %s23
        %p278 = scmp.lt.s32.totalorder %s277, 11
        %s279 = scalar_select %p278, %s277, 11
        %s280 = smul.addr %s279, 8
        %s281 = scalar_lea.vmem %s0, %s280
        %p282 = pneg %p44
        %p283 = pneg %p41
        %p284 = pneg %p65
        %p285 = pneg %p62
        %p286 = pneg %p86
        %p287 = pneg %p83
        %p288 = pneg %p107
        %p289 = pneg %p104
        %p290 = pneg %p128
        %p291 = pneg %p125
        %p292 = pneg %p149
        %p293 = pneg %p146
        %p294 = pneg %p170
        %p295 = pneg %p167
        %p296 = pneg %p196
        %p297 = pneg %p193
        %s298 = sand.u32 %s183, 1
        %s299 = scalar_lea.sflag [#allocation4], %s298
        %s300 = sand.u32 %s183, 1
        %s301 = smul.addr %s300, 32
        %s302 = scalar_lea.vmem [#allocation7], %s301
        %s303 = smul.u32 4, %s23
        %p304 = scmp.lt.s32.totalorder %s303, 11
        %s305 = scalar_select %p304, %s303, 11
        %s306 = smul.addr %s305, 8
        %s307 = scalar_lea.vmem %s0, %s306
        %s308 = smul.u32 4, %s23
        %s309 = smul.u32 4, %s23
        %v310 = vld [vmem:[%s307] sm:$0xff]
        %v311 = vld [vmem:[%s307 + $0x8] sm:$0xff]
        %v312 = vld [vmem:[%s307 + $0x10] sm:$0xff]
        %v313 = vld [vmem:[%s307 + $0x18] sm:$0xff]
        %v314 = vld [vmem:[#allocation2] sm:$0xff]
        %v315 = vld [vmem:[#allocation2 + $0x8] sm:$0xff]
        %v316 = vld [vmem:[#allocation2 + $0x10] sm:$0xff]
        %v317 = vld [vmem:[#allocation2 + $0x18] sm:$0xff]
        %v318 = vld [vmem:[%s2] sm:$0x1]
        %v320 = vlaneseq
        %v321 = vshrl.u32 %v320, 7
        %v322 = vsub.s32 0, %v321
        %v323 = vrot.slane %v318, %v322
        %vm325 = vcmask 261120
        %v327 = vsel %vm325, %v310, 0
        %v330 = vsel %vm325, %v311, 0
        %v333 = vsel %vm325, %v312, 0
        %v336 = vsel %vm325, %v313, 0
        %338 = vmatprep.subr.mxu0 0.0
        %339 = vmatpush1.msra.mxu0 0.0
        %340 = vmatprep.subr.mxu0 0.0
        %341 = vmatpush1.msra.mxu0 0.0
        %342 = vmatprep.subr.mxu0 0.0
        %343 = vmatpush1.msra.mxu0 0.0
        %344 = vmatprep.subr.mxu0 0.0
        %345 = vmatpush1.msra.mxu0 0.0
        %346 = vmatprep.subr.mxu0 0.0
        %347 = vmatpush1.msra.mxu0 0.0
        %348 = vmatprep.subr.mxu0 0.0
        %349 = vmatpush1.msra.mxu0 0.0
        %350 = vmatprep.subr.mxu0 0.0
        %351 = vmatpush1.msra.mxu0 0.0
        %352 = vmatprep.subr.mxu0 0.0
        %353 = vmatpush1.msra.mxu0 0.0
        %354 = vmatprep.subr.mxu0 0.0
        %355 = vmatpush1.msra.mxu0 0.0
        %356 = vmatprep.subr.mxu0 0.0
        %357 = vmatpush1.msra.mxu0 0.0
        %358 = vmatprep.subr.mxu0 0.0
        %359 = vmatpush1.msra.mxu0 0.0
        %360 = vmatprep.subr.mxu0 0.0
        %361 = vmatpush1.msra.mxu0 0.0
        %362 = vmatprep.subr.mxu0 0.0
        %363 = vmatpush1.msra.mxu0 %v317
        %364 = vmatprep.subr.mxu0 0.0
        %365 = vmatpush1.msra.mxu0 %v316
        %366 = vmatprep.subr.mxu0 0.0
        %367 = vmatpush1.msra.mxu0 %v315
        %368 = vmatprep.subr.mxu0 0.0
        %369 = vmatpush1.msra.mxu0 %v314
        %370 = vmatprep.subr.mxu0 0.0
        %371 = vmatpush2.msra.mxu0 0.0
        %372 = vmatprep.subr.mxu0 0.0
        %373 = vmatpush2.msra.mxu0 0.0
        %374 = vmatprep.subr.mxu0 0.0
        %375 = vmatpush2.msra.mxu0 0.0
        %376 = vmatprep.subr.mxu0 0.0
        %377 = vmatpush2.msra.mxu0 0.0
        %378 = vmatprep.subr.mxu0 0.0
        %379 = vmatpush2.msra.mxu0 0.0
        %380 = vmatprep.subr.mxu0 0.0
        %381 = vmatpush2.msra.mxu0 0.0
        %382 = vmatprep.subr.mxu0 0.0
        %383 = vmatpush2.msra.mxu0 0.0
        %384 = vmatprep.subr.mxu0 0.0
        %385 = vmatpush2.msra.mxu0 0.0
        %386 = vmatprep.subr.mxu0 0.0
        %387 = vmatpush2.msra.mxu0 0.0
        %388 = vmatprep.subr.mxu0 0.0
        %389 = vmatpush2.msra.mxu0 0.0
        %390 = vmatprep.subr.mxu0 0.0
        %391 = vmatpush2.msra.mxu0 0.0
        %392 = vmatprep.subr.mxu0 0.0
        %393 = vmatpush2.msra.mxu0 0.0
        %394 = vmatprep.subr.mxu0 0.0
        %395 = vmatpush2.msra.mxu0 0.0
        %396 = vmatprep.subr.mxu0 0.0
        %397 = vmatpush2.msra.mxu0 0.0
        %398 = vmatprep.subr.mxu0 0.0
        %399 = vmatpush2.msra.mxu0 0.0
        %400 = vmatprep.subr.mxu0 0.0
        %401 = vmatpush2.msra.mxu0 0.0
        %402 = vmatprep.mubr.f32.mxu0 0.0
        %403 = vmatmul.mubr.f32.gmra.mxu0 %v327
        %v404 = vpop.f32.mrf.mxu0
        %v405 = vadd.f32 %v323, %v404
        %v406 = vpop.f32.mrf.mxu0
        %407 = vmatprep.mubr.f32.mxu0 0.0
        %408 = vmatmul.mubr.f32.gmra.mxu0 %v330
        %v409 = vpop.f32.mrf.mxu0
        %v410 = vadd.f32 %v323, %v409
        %v411 = vpop.f32.mrf.mxu0
        %412 = vmatprep.mubr.f32.mxu0 0.0
        %413 = vmatmul.mubr.f32.gmra.mxu0 %v333
        %v414 = vpop.f32.mrf.mxu0
        %v415 = vadd.f32 %v323, %v414
        %v416 = vpop.f32.mrf.mxu0
        %417 = vmatprep.mubr.f32.mxu0 0.0
        %418 = vmatmul.mubr.f32.gmra.mxu0 %v336
        %v419 = vpop.f32.mrf.mxu0
        %v420 = vadd.f32 %v323, %v419
        %v421 = vpop.f32.mrf.mxu0
        %422 = vdwg.mxu0
        %v423 = vmax.f32 %v405, 0.0
        %v424 = vmax.f32 %v410, 0.0
        %v425 = vmax.f32 %v415, 0.0
        %v426 = vmax.f32 %v420, 0.0
        %v427 = vld [vmem:[%s3] sm:$0xff]
        %v428 = vld [vmem:[%s3 + $0x8] sm:$0xff]
        %v429 = vld [vmem:[%s3 + $0x10] sm:$0xff]
        %v430 = vld [vmem:[%s3 + $0x18] sm:$0xff]
        %v431 = vld [vmem:[%s3 + $0x20] sm:$0xff]
        %v432 = vld [vmem:[%s3 + $0x28] sm:$0xff]
        %v433 = vld [vmem:[%s3 + $0x30] sm:$0xff]
        %v434 = vld [vmem:[%s3 + $0x38] sm:$0xff]
        %v435 = vld [vmem:[%s3 + $0x40] sm:$0xff]
        %v436 = vld [vmem:[%s3 + $0x48] sm:$0xff]
        %v437 = vld [vmem:[%s3 + $0x50] sm:$0xff]
        %v438 = vld [vmem:[%s3 + $0x58] sm:$0xff]
        %v439 = vld [vmem:[%s3 + $0x60] sm:$0xff]
        %v440 = vld [vmem:[%s3 + $0x68] sm:$0xff]
        %v441 = vld [vmem:[%s3 + $0x70] sm:$0xff]
        %v442 = vld [vmem:[%s3 + $0x78] sm:$0xff]
        %v443 = vld [vmem:[%s4] sm:$0x1]
        %v445 = vlaneseq
        %v446 = vshrl.u32 %v445, 7
        %v447 = vsub.s32 0, %v446
        %v448 = vrot.slane %v443, %v447
        %450 = vmatprep.subr.mxu0 0.0
        %451 = vmatpush1.msra.mxu0 %v442
        %452 = vmatprep.subr.mxu0 0.0
        %453 = vmatpush1.msra.mxu0 %v441
        %454 = vmatprep.subr.mxu0 0.0
        %455 = vmatpush1.msra.mxu0 %v440
        %456 = vmatprep.subr.mxu0 0.0
        %457 = vmatpush1.msra.mxu0 %v439
        %458 = vmatprep.subr.mxu0 0.0
        %459 = vmatpush1.msra.mxu0 %v438
        %460 = vmatprep.subr.mxu0 0.0
        %461 = vmatpush1.msra.mxu0 %v437
        %462 = vmatprep.subr.mxu0 0.0
        %463 = vmatpush1.msra.mxu0 %v436
        %464 = vmatprep.subr.mxu0 0.0
        %465 = vmatpush1.msra.mxu0 %v435
        %466 = vmatprep.subr.mxu0 0.0
        %467 = vmatpush1.msra.mxu0 %v434
        %468 = vmatprep.subr.mxu0 0.0
        %469 = vmatpush1.msra.mxu0 %v433
        %470 = vmatprep.subr.mxu0 0.0
        %471 = vmatpush1.msra.mxu0 %v432
        %472 = vmatprep.subr.mxu0 0.0
        %473 = vmatpush1.msra.mxu0 %v431
        %474 = vmatprep.subr.mxu0 0.0
        %475 = vmatpush1.msra.mxu0 %v430
        %476 = vmatprep.subr.mxu0 0.0
        %477 = vmatpush1.msra.mxu0 %v429
        %478 = vmatprep.subr.mxu0 0.0
        %479 = vmatpush1.msra.mxu0 %v428
        %480 = vmatprep.subr.mxu0 0.0
        %481 = vmatpush1.msra.mxu0 %v427
        %482 = vmatprep.subr.mxu0 0.0
        %483 = vmatpush2.msra.mxu0 0.0
        %484 = vmatprep.subr.mxu0 0.0
        %485 = vmatpush2.msra.mxu0 0.0
        %486 = vmatprep.subr.mxu0 0.0
        %487 = vmatpush2.msra.mxu0 0.0
        %488 = vmatprep.subr.mxu0 0.0
        %489 = vmatpush2.msra.mxu0 0.0
        %490 = vmatprep.subr.mxu0 0.0
        %491 = vmatpush2.msra.mxu0 0.0
        %492 = vmatprep.subr.mxu0 0.0
        %493 = vmatpush2.msra.mxu0 0.0
        %494 = vmatprep.subr.mxu0 0.0
        %495 = vmatpush2.msra.mxu0 0.0
        %496 = vmatprep.subr.mxu0 0.0
        %497 = vmatpush2.msra.mxu0 0.0
        %498 = vmatprep.subr.mxu0 0.0
        %499 = vmatpush2.msra.mxu0 0.0
        %500 = vmatprep.subr.mxu0 0.0
        %501 = vmatpush2.msra.mxu0 0.0
        %502 = vmatprep.subr.mxu0 0.0
        %503 = vmatpush2.msra.mxu0 0.0
        %504 = vmatprep.subr.mxu0 0.0
        %505 = vmatpush2.msra.mxu0 0.0
        %506 = vmatprep.subr.mxu0 0.0
        %507 = vmatpush2.msra.mxu0 0.0
        %508 = vmatprep.subr.mxu0 0.0
        %509 = vmatpush2.msra.mxu0 0.0
        %510 = vmatprep.subr.mxu0 0.0
        %511 = vmatpush2.msra.mxu0 0.0
        %512 = vmatprep.subr.mxu0 0.0
        %513 = vmatpush2.msra.mxu0 0.0
        %514 = vmatprep.mubr.f32.mxu0 0.0
        %515 = vmatmul.mubr.f32.gmra.mxu0 %v423
        %v516 = vpop.f32.mrf.mxu0
        %v517 = vadd.f32 %v448, %v516
        %v518 = vpop.f32.mrf.mxu0
        %519 = vmatprep.mubr.f32.mxu0 0.0
        %520 = vmatmul.mubr.f32.gmra.mxu0 %v424
        %v521 = vpop.f32.mrf.mxu0
        %v522 = vadd.f32 %v448, %v521
        %v523 = vpop.f32.mrf.mxu0
        %524 = vmatprep.mubr.f32.mxu0 0.0
        %525 = vmatmul.mubr.f32.gmra.mxu0 %v425
        %v526 = vpop.f32.mrf.mxu0
        %v527 = vadd.f32 %v448, %v526
        %v528 = vpop.f32.mrf.mxu0
        %529 = vmatprep.mubr.f32.mxu0 0.0
        %530 = vmatmul.mubr.f32.gmra.mxu0 %v426
        %v531 = vpop.f32.mrf.mxu0
        %v532 = vadd.f32 %v448, %v531
        %v533 = vpop.f32.mrf.mxu0
        %534 = vdwg.mxu0
        %v535 = vmax.f32 %v517, 0.0
        %v536 = vmax.f32 %v522, 0.0
        %v537 = vmax.f32 %v527, 0.0
        %v538 = vmax.f32 %v532, 0.0
        %v539 = vld [vmem:[#allocation5] sm:$0xff]
        %v540 = vld [vmem:[#allocation5 + $0x8] sm:$0xff]
        %v541 = vld [vmem:[#allocation5 + $0x10] sm:$0xff]
        %v542 = vld [vmem:[#allocation5 + $0x18] sm:$0xff]
        %v543 = vld [vmem:[#allocation5 + $0x20] sm:$0xff]
        %v544 = vld [vmem:[#allocation5 + $0x28] sm:$0xff]
        %v545 = vld [vmem:[#allocation5 + $0x30] sm:$0xff]
        %v546 = vld [vmem:[#allocation5 + $0x38] sm:$0xff]
        %v547 = vld [vmem:[#allocation5 + $0x40] sm:$0xff]
        %v548 = vld [vmem:[#allocation5 + $0x48] sm:$0xff]
        %v549 = vld [vmem:[#allocation5 + $0x50] sm:$0xff]
        %v550 = vld [vmem:[#allocation5 + $0x58] sm:$0xff]
        %v551 = vld [vmem:[#allocation5 + $0x60] sm:$0xff]
        %v552 = vld [vmem:[#allocation5 + $0x68] sm:$0xff]
        %v553 = vld [vmem:[#allocation5 + $0x70] sm:$0xff]
        %v554 = vld [vmem:[#allocation5 + $0x78] sm:$0xff]
        %v555 = vld [vmem:[%s6] sm:$0x1]
        %v557 = vlaneseq
        %v558 = vshrl.u32 %v557, 7
        %v559 = vsub.s32 0, %v558
        %v560 = vrot.slane %v555, %v559
        %562 = vmatprep.subr.mxu0 0.0
        %563 = vmatpush1.msra.mxu0 %v554
        %564 = vmatprep.subr.mxu0 0.0
        %565 = vmatpush1.msra.mxu0 %v553
        %566 = vmatprep.subr.mxu0 0.0
        %567 = vmatpush1.msra.mxu0 %v552
        %568 = vmatprep.subr.mxu0 0.0
        %569 = vmatpush1.msra.mxu0 %v551
        %570 = vmatprep.subr.mxu0 0.0
        %571 = vmatpush1.msra.mxu0 %v550
        %572 = vmatprep.subr.mxu0 0.0
        %573 = vmatpush1.msra.mxu0 %v549
        %574 = vmatprep.subr.mxu0 0.0
        %575 = vmatpush1.msra.mxu0 %v548
        %576 = vmatprep.subr.mxu0 0.0
        %577 = vmatpush1.msra.mxu0 %v547
        %578 = vmatprep.subr.mxu0 0.0
        %579 = vmatpush1.msra.mxu0 %v546
        %580 = vmatprep.subr.mxu0 0.0
        %581 = vmatpush1.msra.mxu0 %v545
        %582 = vmatprep.subr.mxu0 0.0
        %583 = vmatpush1.msra.mxu0 %v544
        %584 = vmatprep.subr.mxu0 0.0
        %585 = vmatpush1.msra.mxu0 %v543
        %586 = vmatprep.subr.mxu0 0.0
        %587 = vmatpush1.msra.mxu0 %v542
        %588 = vmatprep.subr.mxu0 0.0
        %589 = vmatpush1.msra.mxu0 %v541
        %590 = vmatprep.subr.mxu0 0.0
        %591 = vmatpush1.msra.mxu0 %v540
        %592 = vmatprep.subr.mxu0 0.0
        %593 = vmatpush1.msra.mxu0 %v539
        %594 = vmatprep.subr.mxu0 0.0
        %595 = vmatpush2.msra.mxu0 0.0
        %596 = vmatprep.subr.mxu0 0.0
        %597 = vmatpush2.msra.mxu0 0.0
        %598 = vmatprep.subr.mxu0 0.0
        %599 = vmatpush2.msra.mxu0 0.0
        %600 = vmatprep.subr.mxu0 0.0
        %601 = vmatpush2.msra.mxu0 0.0
        %602 = vmatprep.subr.mxu0 0.0
        %603 = vmatpush2.msra.mxu0 0.0
        %604 = vmatprep.subr.mxu0 0.0
        %605 = vmatpush2.msra.mxu0 0.0
        %606 = vmatprep.subr.mxu0 0.0
        %607 = vmatpush2.msra.mxu0 0.0
        %608 = vmatprep.subr.mxu0 0.0
        %609 = vmatpush2.msra.mxu0 0.0
        %610 = vmatprep.subr.mxu0 0.0
        %611 = vmatpush2.msra.mxu0 0.0
        %612 = vmatprep.subr.mxu0 0.0
        %613 = vmatpush2.msra.mxu0 0.0
        %614 = vmatprep.subr.mxu0 0.0
        %615 = vmatpush2.msra.mxu0 0.0
        %616 = vmatprep.subr.mxu0 0.0
        %617 = vmatpush2.msra.mxu0 0.0
        %618 = vmatprep.subr.mxu0 0.0
        %619 = vmatpush2.msra.mxu0 0.0
        %620 = vmatprep.subr.mxu0 0.0
        %621 = vmatpush2.msra.mxu0 0.0
        %622 = vmatprep.subr.mxu0 0.0
        %623 = vmatpush2.msra.mxu0 0.0
        %624 = vmatprep.subr.mxu0 0.0
        %625 = vmatpush2.msra.mxu0 0.0
        %626 = vmatprep.mubr.f32.mxu0 0.0
        %627 = vmatmul.mubr.f32.gmra.mxu0 %v535
        %v628 = vpop.f32.mrf.mxu0
        %v629 = vadd.f32 %v560, %v628
        %v630 = vpop.f32.mrf.mxu0
        %631 = vmatprep.mubr.f32.mxu0 0.0
        %632 = vmatmul.mubr.f32.gmra.mxu0 %v536
        %v633 = vpop.f32.mrf.mxu0
        %v634 = vadd.f32 %v560, %v633
        %v635 = vpop.f32.mrf.mxu0
        %636 = vmatprep.mubr.f32.mxu0 0.0
        %637 = vmatmul.mubr.f32.gmra.mxu0 %v537
        %v638 = vpop.f32.mrf.mxu0
        %v639 = vadd.f32 %v560, %v638
        %v640 = vpop.f32.mrf.mxu0
        %641 = vmatprep.mubr.f32.mxu0 0.0
        %642 = vmatmul.mubr.f32.gmra.mxu0 %v538
        %v643 = vpop.f32.mrf.mxu0
        %v644 = vadd.f32 %v560, %v643
        %v645 = vpop.f32.mrf.mxu0
        %646 = vdwg.mxu0
        %v647 = vlaneseq
        %v648 = vand.u32 %v647, 127
        %v649 = vtanh.pop %v629
        %v650 = vtanh.pop %v634
        %v651 = vtanh.pop %v639
        %v652 = vtanh.pop %v644
        %v653 = vmax.f32 %v629, 0.0
        %v654 = vmax.f32 %v634, 0.0
        %v655 = vmax.f32 %v639, 0.0
        %v656 = vmax.f32 %v644, 0.0
        %v657 = vand.u32 2147483647, %v629
        %v658 = vand.u32 2147483647, %v634
        %v659 = vand.u32 2147483647, %v639
        %v660 = vand.u32 2147483647, %v644
        %v661 = vsub.f32 0.0, %v657
        %v662 = vsub.f32 0.0, %v658
        %v663 = vsub.f32 0.0, %v659
        %v664 = vsub.f32 0.0, %v660
        %v665 = vmul.f32 %v661, 1.442695
        %v666 = vpow.pop %v665
        %v667 = vmul.f32 %v662, 1.442695
        %v668 = vpow.pop %v667
        %v669 = vmul.f32 %v663, 1.442695
        %v670 = vpow.pop %v669
        %v671 = vmul.f32 %v664, 1.442695
        %v672 = vpow.pop %v671
        %v673 = vadd.f32 %v666, 1.0
        %v674 = vadd.f32 %v668, 1.0
        %v675 = vadd.f32 %v670, 1.0
        %v676 = vadd.f32 %v672, 1.0
        %v677 = vlog2.pop %v673
        %v678 = vmul.f32 %v677, 0.6931472
        %v679 = vlog2.pop %v674
        %v680 = vmul.f32 %v679, 0.6931472
        %v681 = vlog2.pop %v675
        %v682 = vmul.f32 %v681, 0.6931472
        %v683 = vlog2.pop %v676
        %v684 = vmul.f32 %v683, 0.6931472
        %v685 = vadd.f32 %v653, %v678
        %v686 = vadd.f32 %v654, %v680
        %v687 = vadd.f32 %v655, %v682
        %v688 = vadd.f32 %v656, %v684
        %v689 = vadd.f32 %v685, 0.0001
        %v690 = vadd.f32 %v686, 0.0001
        %v691 = vadd.f32 %v687, 0.0001
        %v692 = vadd.f32 %v688, 0.0001
        %vm693 = vcmp.lt.s32.totalorder %v648, 35
        %vm694 = vcmp.lt.s32.totalorder %v648, 70
        %v695 = vsel %vm694, %v689, %v629
        %v696 = vsel %vm694, %v690, %v634
        %v697 = vsel %vm694, %v691, %v639
        %v698 = vsel %vm694, %v692, %v644
        %v699 = vsel %vm693, %v649, %v695
        %v700 = vsel %vm693, %v650, %v696
        %v701 = vsel %vm693, %v651, %v697
        %v702 = vsel %vm693, %v652, %v698
        %703 = vst [vmem:[%s302] sm:$0xff] %v699
        %704 = vst [vmem:[%s302 + $0x8] sm:$0xff] %v700
        %705 = vst [vmem:[%s302 + $0x10] sm:$0xff] %v701
        %706 = vst [vmem:[%s302 + $0x18] sm:$0xff] %v702
        %s707 = sand.u32 %s183, 1
        %s708 = scalar_lea.sflag [#allocation4], %s707
        %s709 = sand.u32 %s183, 1
        %s710 = smul.addr %s709, 32
        %s711 = scalar_lea.vmem [#allocation7], %s710
        // Predicated region
        $region57: #{tpu_custom_call.1} parent=47 // pred_check
          %p712 = pneg %p193
        $region58: #{tpu_custom_call.1} parent=47 // pred_check_branch
          %714 = sbr.rel (%p712) target = $region60
        $region59: #{tpu_custom_call.1} parent=47 // pred_region
          %s715 = smul.u32 4, %s23
          %s717 = ssub.s32 512, 512
          %718 = vsyncadd %s708, %s717
          %s719 = smul.addr %s715, 128
          %s720 = scalar_lea.hbm %s7, %s719
          %s721 = sshll.u32 %s711, 4
          %s722 = int_to_ptr.vmem [resolvable:$true] %s721
          %727 = dma.vmem_to_hbm [thread:$0]  %s722, 512, %s720, %s708, 128, 128, 8
        $region60: #{tpu_custom_call.1} parent=47 // pred_fallthru
          _
      $region48: #{tpu_custom_call.1} parent=5 // pred_fallthru
        _
      %p728 = scmp.le.s32.totalorder 2, %s18
      // Predicated region
      $region61: #{tpu_custom_call.1} parent=5 // pred_check
        %p729 = pneg %p728
      $region62: #{tpu_custom_call.1} parent=5 // pred_check_branch
        %731 = sbr.rel (%p729) target = $region64
      $region63: #{tpu_custom_call.1} parent=5 // pred_region
        %s732 = ssub.s32 %s18, 2
        // Predicated region
        $region65: #{tpu_custom_call.1} parent=63 // pred_check
          %p733 = pneg %p199
        $region66: #{tpu_custom_call.1} parent=63 // pred_check_branch
          %735 = sbr.rel (%p733) target = $region68
        $region67: #{tpu_custom_call.1} parent=63 // pred_region
          %s736 = sand.u32 %s184, 1
          %s737 = scalar_lea.sflag [#allocation4], %s736
          %s738 = sand.u32 %s184, 1
          %s739 = smul.addr %s738, 32
          %s740 = scalar_lea.vmem [#allocation7], %s739
          %741 = dma.done %s737, 512
        $region68: #{tpu_custom_call.1} parent=63 // pred_fallthru
          _
      $region64: #{tpu_custom_call.1} parent=5 // pred_fallthru
        _
    $region6: #{tpu_custom_call.1} parent=1 // loop_footer
      %s22 = sadd.s32 1, %s18
    $region7: #{tpu_custom_call.1} parent=1 // loop_footer_branch
      %17 = sbr.rel target = $region3
    $region8: #{tpu_custom_call.1} parent=1 // loop_exit
      _
    %742 = vsyncpa [#allocation3], 1
    %s743 = scalar_lea.sflag [#allocation3], 1
    %744 = vsyncpa %s743, 1
    %745 = vsyncpa [#allocation6], 1
    %746 = vsyncpa [#allocation4], 1
    %s747 = scalar_lea.sflag [#allocation4], 1
    %748 = vsyncpa %s747, 1

</llo_original>
